<compile_context>
chip_gen: v6e
topology: v6e:2x2x1
jax: 0.10.0
libtpu: 0.0.40
codegen_flags: <defaults>
</compile_context>

<pallas_src>
import jax
import jax.numpy as jnp
from jax.experimental import pallas as pl
from jax.experimental.pallas import tpu as pltpu


def _round_up(a: int, b: int) -> int:
    return ((a + b - 1) // b) * b


def _cdiv(a: int, b: int) -> int:
    return (a + b - 1) // b


# Below ~128K MACs the pallas_call launch + per-step (~0.35 us) overhead dwarfs
# the matmul; plain XLA dot is strictly faster there.
_MIN_PALLAS_MACS = 1 << 17


def _make_kernel(cast_to_bf16: bool, precision):
    def kernel(x_ref, w_ref, o_ref):
        x = x_ref[...]
        w = w_ref[...]
        if cast_to_bf16:
            # In-kernel cast: avoids a separate XLA pass over both operands.
            x = x.astype(jnp.bfloat16)
            w = w.astype(jnp.bfloat16)
        o_ref[...] = jnp.dot(
            x, w, preferred_element_type=jnp.float32, precision=precision
        ).astype(o_ref.dtype)

    return kernel


def _device_limits():
    """Return (vmem_capacity_bytes, tensorcores_per_chip), conservatively defaulted."""
    vmem = None
    cores = 1
    try:
        info = pltpu.get_tpu_info()
        for attr in ("vmem_capacity_bytes", "vmem_bytes", "vmem_size_bytes"):
            v = getattr(info, attr, None)
            if isinstance(v, int) and v > 0:
                vmem = v
                break
    except Exception:
        pass
    try:
        kind = jax.devices()[0].device_kind.lower()
    except Exception:
        kind = ""
    if "7" in kind:                               # v7x: 2 TCs, 64 MiB VMEM / TC
        cores = 2
        if vmem is None:
            vmem = 64 * 1024 * 1024
    elif ("v5" in kind) or ("v6" in kind):        # v5e/v6e: 1 TC, 128 MiB VMEM
        if vmem is None:
            vmem = 128 * 1024 * 1024
    if vmem is None:
        vmem = 64 * 1024 * 1024                   # unknown part: assume small VMEM
    return vmem, cores


def _choose_tiles(B, K, N, x_isz, w_isz, o_isz, vmem_budget, num_cores):
    # Sublane packing: bf16 packs 16 rows per vreg, f32 packs 8.
    sub = 16 if x_isz <= 2 else 8

    # M tile: up to 256 to fill the 256x256 MXU on v6e/v7x (two MXU passes on
    # v5e's 128x128 MXU is still fine and halves the grid-step count).
    tm = min(256, _round_up(B, sub))
    if tm > B:
        tm = B          # full-extent block (allowed for any B)

    # N tile: lane-dense, and big enough to cover all of N when VMEM allows so
    # the weight is DMA'd exactly once.
    tn = min(_round_up(N, 128), 2048)
    if tn > N:
        tn = N          # full-extent block

    def footprint(tm_, tn_):
        # Double-buffered x / weight / output blocks.
        return 2 * (tm_ * K * x_isz + K * tn_ * w_isz + tm_ * tn_ * o_isz)

    while footprint(tm, tn) > vmem_budget and tn > 128:
        tn = max(128, ((tn // 2) // 128) * 128)
    while footprint(tm, tn) > vmem_budget and tm > sub:
        tm = max(sub, ((tm // 2) // sub) * sub)
    # TODO(synk): a K-tiled accumulator path would be needed for extreme in_dim;
    # projection heads (in_dim <= a few thousand) never hit this.

    # v7x has 2 TensorCores: make sure the parallel grid has >= 2 steps so both
    # get work.  Skipped on 1-TC parts (a 1-step grid is optimal there).
    if num_cores >= 2 and _cdiv(B, tm) * _cdiv(N, tn) < 2:
        if B > sub:
            tm = max(sub, _round_up(_cdiv(B, 2), sub))
            if tm > B:
                tm = B
        elif N > 128 and tn > 128:
            tn = max(128, ((tn // 2) // 128) * 128)
    return tm, tn


def simple_image_projection_head(
    x, proj, *, cast_to_bf16=False, precision=None, tm=None, tn=None
):
    """x: [B, in_dim] @ proj: [in_dim, out_dim] -> [B, out_dim] (dtype of x)."""
    assert x.ndim == 2, f"Input should be 2-dimensional (Batch x in_dim). Got: {x.shape}"
    B, K = x.shape
    K2, N = proj.shape
    assert K == K2, f"in_dim mismatch: {K} vs {K2}"
    out_dtype = x.dtype

    # Tiny-shape fallback: plain XLA beats any Pallas launch at this size.
    if B * K * N < _MIN_PALLAS_MACS:
        return jnp.dot(x, proj, precision=precision).astype(out_dtype)

    x_isz = jnp.dtype(x.dtype).itemsize
    w_isz = jnp.dtype(proj.dtype).itemsize
    o_isz = jnp.dtype(out_dtype).itemsize

    vmem_cap, num_cores = _device_limits()
    vmem_budget = (7 * vmem_cap) // 10            # ~90 MiB (v5e/v6e), ~45 MiB (v7x)
    vmem_limit = min((4 * vmem_cap) // 5, 128 * 1024 * 1024)

    tm_d, tn_d = _choose_tiles(B, K, N, x_isz, w_isz, o_isz, vmem_budget, num_cores)
    tm = tm_d if tm is None else tm
    tn = tn_d if tn is None else tn
    # Validate tile choices / user overrides against the (8,128) rule.
    assert (tm % 8 == 0) or (tm == B), f"tm={tm} must be a multiple of 8 or equal B={B}"
    assert (tn % 128 == 0) or (tn == N), f"tn={tn} must be a multiple of 128 or equal N={N}"
    assert 0 < tm <= B and 0 < tn <= N, f"tile ({tm},{tn}) exceeds array ({B},{N})"

    # N outer (slow), M inner (fast): weight block stays resident across each
    # inner M sweep; x streams.
    grid = (_cdiv(N, tn), _cdiv(B, tm))

    cost = pl.CostEstimate(
        flops=2 * B * K * N,
        transcendentals=0,
        bytes_accessed=B * K * x_isz + K * N * w_isz + B * N * o_isz,
    )

    kernel = _make_kernel(bool(cast_to_bf16), precision)

    out = pl.pallas_call(
        kernel,
        out_shape=jax.ShapeDtypeStruct((B, N), out_dtype),
        grid_spec=pltpu.PrefetchScalarGridSpec(
            num_scalar_prefetch=0,
            grid=grid,
            in_specs=[
                # x block (tm, K): streams over M on the inner axis, full K.
                pl.BlockSpec((tm, K), lambda j, i: (i, 0)),
                # weight block (K, tn): block index is constant across the
                # inner M sweep -> DMA'd once per N block (once total if tn==N).
                # TODO(synk): pipeline_mode=pl.Buffered(1) would drop the dead
                # second weight buffer when tn == N (frees VMEM on v7x).
                pl.BlockSpec((K, tn), lambda j, i: (0, j)),
            ],
            out_specs=pl.BlockSpec((tm, tn), lambda j, i: (i, j)),
        ),
        compiler_params=pltpu.CompilerParams(
            dimension_semantics=("parallel", "parallel"),
            vmem_limit_bytes=int(vmem_limit),
        ),
        cost_estimate=cost,
    )(x, proj)
    return out


if __name__ == "__main__":
    key = jax.random.PRNGKey(0)
    k1, k2, k3, k4, k5, k6 = jax.random.split(key, 6)

    # Case 1: tiny module-scale shapes -> plain-XLA fallback path.
    b1, in1, out1 = 2, 32, 64
    x_small = jax.random.normal(k1, (b1, in1), dtype=jnp.float32)
    proj_small = (in1 ** -0.5) * jax.random.normal(k2, (in1, out1), dtype=jnp.float32)
    y_small = jax.block_until_ready(simple_image_projection_head(x_small, proj_small))
    assert y_small.shape == (b1, out1)
    assert jnp.allclose(y_small, x_small @ proj_small, atol=1e-5, rtol=1e-5)

    # Case 2: realistic projection-head shapes -> Pallas kernel path
    # (resident weight, single or dual M blocks depending on TC count).
    b2, in2, out2 = 256, 512, 512
    x_big = jax.random.normal(k3, (b2, in2), dtype=jnp.float32)
    proj_big = (in2 ** -0.5) * jax.random.normal(k4, (in2, out2), dtype=jnp.float32)
    ref = x_big @ proj_big

    y_f32 = jax.block_until_ready(simple_image_projection_head(x_big, proj_big))
    assert y_f32.shape == (b2, out2)
    assert jnp.allclose(y_f32, ref, atol=2e-2, rtol=2e-2)

    # bf16-operand path (cast inside the kernel, f32 accumulate) — looser tol.
    y_bf16 = jax.block_until_ready(
        simple_image_projection_head(x_big, proj_big, cast_to_bf16=True)
    )
    assert y_bf16.shape == (b2, out2)
    assert jnp.allclose(y_bf16, ref, atol=1e-1, rtol=1e-1)

    # Case 3: non-tile-aligned B and N — exercises masked edge blocks with no
    # wrapper-side pad/slice.
    b3, in3, out3 = 300, 512, 400
    x_odd = jax.random.normal(k5, (b3, in3), dtype=jnp.float32)
    proj_odd = (in3 ** -0.5) * jax.random.normal(k6, (in3, out3), dtype=jnp.float32)
    y_odd = jax.block_until_ready(simple_image_projection_head(x_odd, proj_odd))
    assert y_odd.shape == (b3, out3)
    assert jnp.allclose(y_odd, x_odd @ proj_odd, atol=2e-2, rtol=2e-2)

    print("KERNEL_OK")
</pallas_src>

<mosaic_0001>
module attributes {stable_mosaic.version = 11 : i64} {
  func.func @kernel(%arg0: i32, %arg1: i32, %arg2: memref<256x512xf32, #tpu.memory_space<vmem>>, %arg3: memref<512x512xf32, #tpu.memory_space<vmem>>, %arg4: memref<256x512xf32, #tpu.memory_space<vmem>>) attributes {dimension_semantics = [#tpu.dimension_semantics<parallel>, #tpu.dimension_semantics<parallel>], iteration_bounds = array<i64: 1, 1>, scalar_prefetch = 0 : i64, scratch_operands = 0 : i64, tpu.core_type = #tpu.core_type<tc>, window_params = [{transform_indices = @transform_0, window_bounds = array<i64: 256, 512>}, {transform_indices = @transform_1, window_bounds = array<i64: 512, 512>}, {transform_indices = @transform_2, window_bounds = array<i64: 256, 512>}]} {
    %c0 = arith.constant 0 : index
    %c0_0 = arith.constant 0 : index
    %0 = vector.load %arg2[%c0, %c0_0] : memref<256x512xf32, #tpu.memory_space<vmem>>, vector<256x512xf32>
    %c0_1 = arith.constant 0 : index
    %c0_2 = arith.constant 0 : index
    %1 = vector.load %arg3[%c0_1, %c0_2] : memref<512x512xf32, #tpu.memory_space<vmem>>, vector<512x512xf32>
    %cst = arith.constant dense<0.000000e+00> : vector<256x512xf32>
    %2 = tpu.matmul %0, %1, %cst {dimension_numbers = #tpu.dot_dimension_numbers<[1], [0], [0], [1], [0, 0, 1, 1], [], []>} : vector<256x512xf32>, vector<512x512xf32>, vector<256x512xf32> -> vector<256x512xf32>
    %c0_3 = arith.constant 0 : index
    %c0_4 = arith.constant 0 : index
    %3 = vector.load %arg4[%c0_3, %c0_4] : memref<256x512xf32, #tpu.memory_space<vmem>>, vector<256x512xf32>
    tpu.vector_store %arg4[%c0_3, %c0_4], %2 {strides = array<i32>} : memref<256x512xf32, #tpu.memory_space<vmem>>, vector<256x512xf32>,
    return
  }
  func.func @transform_0(%arg0: i32, %arg1: i32) -> (i32, i32) {
    %c0_i32 = arith.constant 0 : i32
    %c0_i32_0 = arith.constant 0 : i32
    return %arg1, %c0_i32 : i32, i32
  }
  func.func @transform_1(%arg0: i32, %arg1: i32) -> (i32, i32) {
    %c0_i32 = arith.constant 0 : i32
    %c0_i32_0 = arith.constant 0 : i32
    return %c0_i32, %arg0 : i32, i32
  }
  func.func @transform_2(%arg0: i32, %arg1: i32) -> (i32, i32) {
    %c0_i32 = arith.constant 0 : i32
    return %arg1, %arg0 : i32, i32
  }
}

</mosaic_0001>

<llo_original>
// kernel: tpu_custom_call.1
$region0: #{tpu_custom_call.1}
  #allocation0 [shape = 'u32[]', space=smem, size = 0x4, offset = 0x4, fixed_abs, tag = 'smem constant byte address 0x4 - core index']
  #allocation1 [shape = 'u32[144,128]{1,0:T(1,128)}', space=vmem, size = 0x12000, scoped, tag = 'internal scratch']
  %s0 = inlined_call_operand.hbm [shape: f32[256,512], index: 0, kind: input, shape index: {}]
  %s1 = inlined_call_operand.hbm [shape: f32[512,512], index: 1, kind: input, shape index: {}]
  %s2 = inlined_call_operand.hbm [shape: f32[256,512], index: 2, kind: output, shape index: {}]
  %s3 = sld [smem:[#allocation0]]
  $region26: #{tpu_custom_call.1} parent=0
    _
  %s5 = ssub.s32 1, %s3
  %s6 = scalar_select 0, %s5, %s3
  $region1: #{tpu_custom_call.1} parent=0
    #allocation2 [shape = 'u8[524288]{0}', space=vmem, size = 0x80000, scoped, tag = 'input window, operand 0, single buffered']
    #allocation3 [shape = 's32[1]{0}', space=sflag, size = 0x4, scoped, tag = 'scoped memory for tpu_custom_call.1']
    #allocation4 [shape = 's32[1]{0}', space=sflag, size = 0x4, scoped, tag = 'scoped memory for tpu_custom_call.1']
    #allocation5 [shape = 'u8[1048576]{0}', space=vmem, size = 0x100000, scoped, tag = 'input window, operand 1, single buffered']
    #allocation6 [shape = 's32[1]{0}', space=sflag, size = 0x4, scoped, tag = 'scoped memory for tpu_custom_call.1']
    #allocation7 [shape = 'u8[524288]{0}', space=vmem, size = 0x80000, scoped, tag = 'output window, operand 0, single buffered']
    %7 = vsyncpa [#allocation3], 0
    %8 = vsyncpa [#allocation6], 0
    %9 = vsyncpa [#allocation4], 0
    // Predicated region
    $region2: #{tpu_custom_call.1} parent=1 // pred_check
      _
    $region3: #{tpu_custom_call.1} parent=1 // pred_check_branch
      %11 = sbr.rel (0) target = $region5
    $region4: #{tpu_custom_call.1} parent=1 // pred_region
      %s13 = ssub.s32 16384, 16384
      %14 = vsyncadd [#allocation3], %s13
      %s15 = sshll.u32 [#allocation2], 4
      %s16 = int_to_ptr.vmem [resolvable:$true] %s15
      %21 = dma.hbm_to_vmem [thread:$0]  %s0, 16384, %s16, [#allocation3], 512, 512, 32
    $region5: #{tpu_custom_call.1} parent=1 // pred_fallthru
      _
    // Predicated region
    $region6: #{tpu_custom_call.1} parent=1 // pred_check
      _
    $region7: #{tpu_custom_call.1} parent=1 // pred_check_branch
      %23 = sbr.rel (0) target = $region9
    $region8: #{tpu_custom_call.1} parent=1 // pred_region
      %s25 = ssub.s32 32768, 32768
      %26 = vsyncadd [#allocation6], %s25
      %s27 = sshll.u32 [#allocation5], 4
      %s28 = int_to_ptr.vmem [resolvable:$true] %s27
      %33 = dma.hbm_to_vmem [thread:$0]  %s1, 32768, %s28, [#allocation6], 512, 512, 32
    $region9: #{tpu_custom_call.1} parent=1 // pred_fallthru
      _
    // Predicated region
    $region10: #{tpu_custom_call.1} parent=1 // pred_check
      _
    $region11: #{tpu_custom_call.1} parent=1 // pred_check_branch
      %35 = sbr.rel (0) target = $region13
    $region12: #{tpu_custom_call.1} parent=1 // pred_region
      %36 = dma.done [#allocation3], 16384
    $region13: #{tpu_custom_call.1} parent=1 // pred_fallthru
      _
    // Predicated region
    $region14: #{tpu_custom_call.1} parent=1 // pred_check
      _
    $region15: #{tpu_custom_call.1} parent=1 // pred_check_branch
      %38 = sbr.rel (0) target = $region17
    $region16: #{tpu_custom_call.1} parent=1 // pred_region
      %39 = dma.done [#allocation6], 32768
    $region17: #{tpu_custom_call.1} parent=1 // pred_fallthru
      _
    %v40 = vld [vmem:[#allocation2] sm:$0xff]
    %v41 = vld [vmem:[#allocation2 + $0x8] sm:$0xff]
    %v42 = vld [vmem:[#allocation2 + $0x10] sm:$0xff]
    %v43 = vld [vmem:[#allocation2 + $0x18] sm:$0xff]
    %v44 = vld [vmem:[#allocation2 + $0x20] sm:$0xff]
    %v45 = vld [vmem:[#allocation2 + $0x28] sm:$0xff]
    %v46 = vld [vmem:[#allocation2 + $0x30] sm:$0xff]
    %v47 = vld [vmem:[#allocation2 + $0x38] sm:$0xff]
    %v48 = vld [vmem:[#allocation2 + $0x40] sm:$0xff]
    %v49 = vld [vmem:[#allocation2 + $0x48] sm:$0xff]
    %v50 = vld [vmem:[#allocation2 + $0x50] sm:$0xff]
    %v51 = vld [vmem:[#allocation2 + $0x58] sm:$0xff]
    %v52 = vld [vmem:[#allocation2 + $0x60] sm:$0xff]
    %v53 = vld [vmem:[#allocation2 + $0x68] sm:$0xff]
    %v54 = vld [vmem:[#allocation2 + $0x70] sm:$0xff]
    %v55 = vld [vmem:[#allocation2 + $0x78] sm:$0xff]
    %v56 = vld [vmem:[#allocation2 + $0x80] sm:$0xff]
    %v57 = vld [vmem:[#allocation2 + $0x88] sm:$0xff]
    %v58 = vld [vmem:[#allocation2 + $0x90] sm:$0xff]
    %v59 = vld [vmem:[#allocation2 + $0x98] sm:$0xff]
    %v60 = vld [vmem:[#allocation2 + $0xa0] sm:$0xff]
    %v61 = vld [vmem:[#allocation2 + $0xa8] sm:$0xff]
    %v62 = vld [vmem:[#allocation2 + $0xb0] sm:$0xff]
    %v63 = vld [vmem:[#allocation2 + $0xb8] sm:$0xff]
    %v64 = vld [vmem:[#allocation2 + $0xc0] sm:$0xff]
    %v65 = vld [vmem:[#allocation2 + $0xc8] sm:$0xff]
    %v66 = vld [vmem:[#allocation2 + $0xd0] sm:$0xff]
    %v67 = vld [vmem:[#allocation2 + $0xd8] sm:$0xff]
    %v68 = vld [vmem:[#allocation2 + $0xe0] sm:$0xff]
    %v69 = vld [vmem:[#allocation2 + $0xe8] sm:$0xff]
    %v70 = vld [vmem:[#allocation2 + $0xf0] sm:$0xff]
    %v71 = vld [vmem:[#allocation2 + $0xf8] sm:$0xff]
    %v72 = vld [vmem:[#allocation2 + $0x100] sm:$0xff]
    %v73 = vld [vmem:[#allocation2 + $0x108] sm:$0xff]
    %v74 = vld [vmem:[#allocation2 + $0x110] sm:$0xff]
    %v75 = vld [vmem:[#allocation2 + $0x118] sm:$0xff]
    %v76 = vld [vmem:[#allocation2 + $0x120] sm:$0xff]
    %v77 = vld [vmem:[#allocation2 + $0x128] sm:$0xff]
    %v78 = vld [vmem:[#allocation2 + $0x130] sm:$0xff]
    %v79 = vld [vmem:[#allocation2 + $0x138] sm:$0xff]
    %v80 = vld [vmem:[#allocation2 + $0x140] sm:$0xff]
    %v81 = vld [vmem:[#allocation2 + $0x148] sm:$0xff]
    %v82 = vld [vmem:[#allocation2 + $0x150] sm:$0xff]
    %v83 = vld [vmem:[#allocation2 + $0x158] sm:$0xff]
    %v84 = vld [vmem:[#allocation2 + $0x160] sm:$0xff]
    %v85 = vld [vmem:[#allocation2 + $0x168] sm:$0xff]
    %v86 = vld [vmem:[#allocation2 + $0x170] sm:$0xff]
    %v87 = vld [vmem:[#allocation2 + $0x178] sm:$0xff]
    %v88 = vld [vmem:[#allocation2 + $0x180] sm:$0xff]
    %v89 = vld [vmem:[#allocation2 + $0x188] sm:$0xff]
    %v90 = vld [vmem:[#allocation2 + $0x190] sm:$0xff]
    %v91 = vld [vmem:[#allocation2 + $0x198] sm:$0xff]
    %v92 = vld [vmem:[#allocation2 + $0x1a0] sm:$0xff]
    %v93 = vld [vmem:[#allocation2 + $0x1a8] sm:$0xff]
    %v94 = vld [vmem:[#allocation2 + $0x1b0] sm:$0xff]
    %v95 = vld [vmem:[#allocation2 + $0x1b8] sm:$0xff]
    %v96 = vld [vmem:[#allocation2 + $0x1c0] sm:$0xff]
    %v97 = vld [vmem:[#allocation2 + $0x1c8] sm:$0xff]
    %v98 = vld [vmem:[#allocation2 + $0x1d0] sm:$0xff]
    %v99 = vld [vmem:[#allocation2 + $0x1d8] sm:$0xff]
    %v100 = vld [vmem:[#allocation2 + $0x1e0] sm:$0xff]
    %v101 = vld [vmem:[#allocation2 + $0x1e8] sm:$0xff]
    %v102 = vld [vmem:[#allocation2 + $0x1f0] sm:$0xff]
    %v103 = vld [vmem:[#allocation2 + $0x1f8] sm:$0xff]
    %v104 = vld [vmem:[#allocation2 + $0x200] sm:$0xff]
    %v105 = vld [vmem:[#allocation2 + $0x208] sm:$0xff]
    %v106 = vld [vmem:[#allocation2 + $0x210] sm:$0xff]
    %v107 = vld [vmem:[#allocation2 + $0x218] sm:$0xff]
    %v108 = vld [vmem:[#allocation2 + $0x220] sm:$0xff]
    %v109 = vld [vmem:[#allocation2 + $0x228] sm:$0xff]
    %v110 = vld [vmem:[#allocation2 + $0x230] sm:$0xff]
    %v111 = vld [vmem:[#allocation2 + $0x238] sm:$0xff]
    %v112 = vld [vmem:[#allocation2 + $0x240] sm:$0xff]
    %v113 = vld [vmem:[#allocation2 + $0x248] sm:$0xff]
    %v114 = vld [vmem:[#allocation2 + $0x250] sm:$0xff]
    %v115 = vld [vmem:[#allocation2 + $0x258] sm:$0xff]
    %v116 = vld [vmem:[#allocation2 + $0x260] sm:$0xff]
    %v117 = vld [vmem:[#allocation2 + $0x268] sm:$0xff]
    %v118 = vld [vmem:[#allocation2 + $0x270] sm:$0xff]
    %v119 = vld [vmem:[#allocation2 + $0x278] sm:$0xff]
    %v120 = vld [vmem:[#allocation2 + $0x280] sm:$0xff]
    %v121 = vld [vmem:[#allocation2 + $0x288] sm:$0xff]
    %v122 = vld [vmem:[#allocation2 + $0x290] sm:$0xff]
    %v123 = vld [vmem:[#allocation2 + $0x298] sm:$0xff]
    %v124 = vld [vmem:[#allocation2 + $0x2a0] sm:$0xff]
    %v125 = vld [vmem:[#allocation2 + $0x2a8] sm:$0xff]
    %v126 = vld [vmem:[#allocation2 + $0x2b0] sm:$0xff]
    %v127 = vld [vmem:[#allocation2 + $0x2b8] sm:$0xff]
    %v128 = vld [vmem:[#allocation2 + $0x2c0] sm:$0xff]
    %v129 = vld [vmem:[#allocation2 + $0x2c8] sm:$0xff]
    %v130 = vld [vmem:[#allocation2 + $0x2d0] sm:$0xff]
    %v131 = vld [vmem:[#allocation2 + $0x2d8] sm:$0xff]
    %v132 = vld [vmem:[#allocation2 + $0x2e0] sm:$0xff]
    %v133 = vld [vmem:[#allocation2 + $0x2e8] sm:$0xff]
    %v134 = vld [vmem:[#allocation2 + $0x2f0] sm:$0xff]
    %v135 = vld [vmem:[#allocation2 + $0x2f8] sm:$0xff]
    %v136 = vld [vmem:[#allocation2 + $0x300] sm:$0xff]
    %v137 = vld [vmem:[#allocation2 + $0x308] sm:$0xff]
    %v138 = vld [vmem:[#allocation2 + $0x310] sm:$0xff]
    %v139 = vld [vmem:[#allocation2 + $0x318] sm:$0xff]
    %v140 = vld [vmem:[#allocation2 + $0x320] sm:$0xff]
    %v141 = vld [vmem:[#allocation2 + $0x328] sm:$0xff]
    %v142 = vld [vmem:[#allocation2 + $0x330] sm:$0xff]
    %v143 = vld [vmem:[#allocation2 + $0x338] sm:$0xff]
    %v144 = vld [vmem:[#allocation2 + $0x340] sm:$0xff]
    %v145 = vld [vmem:[#allocation2 + $0x348] sm:$0xff]
    %v146 = vld [vmem:[#allocation2 + $0x350] sm:$0xff]
    %v147 = vld [vmem:[#allocation2 + $0x358] sm:$0xff]
    %v148 = vld [vmem:[#allocation2 + $0x360] sm:$0xff]
    %v149 = vld [vmem:[#allocation2 + $0x368] sm:$0xff]
    %v150 = vld [vmem:[#allocation2 + $0x370] sm:$0xff]
    %v151 = vld [vmem:[#allocation2 + $0x378] sm:$0xff]
    %v152 = vld [vmem:[#allocation2 + $0x380] sm:$0xff]
    %v153 = vld [vmem:[#allocation2 + $0x388] sm:$0xff]
    %v154 = vld [vmem:[#allocation2 + $0x390] sm:$0xff]
    %v155 = vld [vmem:[#allocation2 + $0x398] sm:$0xff]
    %v156 = vld [vmem:[#allocation2 + $0x3a0] sm:$0xff]
    %v157 = vld [vmem:[#allocation2 + $0x3a8] sm:$0xff]
    %v158 = vld [vmem:[#allocation2 + $0x3b0] sm:$0xff]
    %v159 = vld [vmem:[#allocation2 + $0x3b8] sm:$0xff]
    %v160 = vld [vmem:[#allocation2 + $0x3c0] sm:$0xff]
    %v161 = vld [vmem:[#allocation2 + $0x3c8] sm:$0xff]
    %v162 = vld [vmem:[#allocation2 + $0x3d0] sm:$0xff]
    %v163 = vld [vmem:[#allocation2 + $0x3d8] sm:$0xff]
    %v164 = vld [vmem:[#allocation2 + $0x3e0] sm:$0xff]
    %v165 = vld [vmem:[#allocation2 + $0x3e8] sm:$0xff]
    %v166 = vld [vmem:[#allocation2 + $0x3f0] sm:$0xff]
    %v167 = vld [vmem:[#allocation2 + $0x3f8] sm:$0xff]
    %v168 = vld [vmem:[#allocation5] sm:$0xff]
    %v169 = vld [vmem:[#allocation5 + $0x8] sm:$0xff]
    %v170 = vld [vmem:[#allocation5 + $0x10] sm:$0xff]
    %v171 = vld [vmem:[#allocation5 + $0x18] sm:$0xff]
    %v172 = vld [vmem:[#allocation5 + $0x20] sm:$0xff]
    %v173 = vld [vmem:[#allocation5 + $0x28] sm:$0xff]
    %v174 = vld [vmem:[#allocation5 + $0x30] sm:$0xff]
    %v175 = vld [vmem:[#allocation5 + $0x38] sm:$0xff]
    %v176 = vld [vmem:[#allocation5 + $0x40] sm:$0xff]
    %v177 = vld [vmem:[#allocation5 + $0x48] sm:$0xff]
    %v178 = vld [vmem:[#allocation5 + $0x50] sm:$0xff]
    %v179 = vld [vmem:[#allocation5 + $0x58] sm:$0xff]
    %v180 = vld [vmem:[#allocation5 + $0x60] sm:$0xff]
    %v181 = vld [vmem:[#allocation5 + $0x68] sm:$0xff]
    %v182 = vld [vmem:[#allocation5 + $0x70] sm:$0xff]
    %v183 = vld [vmem:[#allocation5 + $0x78] sm:$0xff]
    %v184 = vld [vmem:[#allocation5 + $0x80] sm:$0xff]
    %v185 = vld [vmem:[#allocation5 + $0x88] sm:$0xff]
    %v186 = vld [vmem:[#allocation5 + $0x90] sm:$0xff]
    %v187 = vld [vmem:[#allocation5 + $0x98] sm:$0xff]
    %v188 = vld [vmem:[#allocation5 + $0xa0] sm:$0xff]
    %v189 = vld [vmem:[#allocation5 + $0xa8] sm:$0xff]
    %v190 = vld [vmem:[#allocation5 + $0xb0] sm:$0xff]
    %v191 = vld [vmem:[#allocation5 + $0xb8] sm:$0xff]
    %v192 = vld [vmem:[#allocation5 + $0xc0] sm:$0xff]
    %v193 = vld [vmem:[#allocation5 + $0xc8] sm:$0xff]
    %v194 = vld [vmem:[#allocation5 + $0xd0] sm:$0xff]
    %v195 = vld [vmem:[#allocation5 + $0xd8] sm:$0xff]
    %v196 = vld [vmem:[#allocation5 + $0xe0] sm:$0xff]
    %v197 = vld [vmem:[#allocation5 + $0xe8] sm:$0xff]
    %v198 = vld [vmem:[#allocation5 + $0xf0] sm:$0xff]
    %v199 = vld [vmem:[#allocation5 + $0xf8] sm:$0xff]
    %v200 = vld [vmem:[#allocation5 + $0x100] sm:$0xff]
    %v201 = vld [vmem:[#allocation5 + $0x108] sm:$0xff]
    %v202 = vld [vmem:[#allocation5 + $0x110] sm:$0xff]
    %v203 = vld [vmem:[#allocation5 + $0x118] sm:$0xff]
    %v204 = vld [vmem:[#allocation5 + $0x120] sm:$0xff]
    %v205 = vld [vmem:[#allocation5 + $0x128] sm:$0xff]
    %v206 = vld [vmem:[#allocation5 + $0x130] sm:$0xff]
    %v207 = vld [vmem:[#allocation5 + $0x138] sm:$0xff]
    %v208 = vld [vmem:[#allocation5 + $0x140] sm:$0xff]
    %v209 = vld [vmem:[#allocation5 + $0x148] sm:$0xff]
    %v210 = vld [vmem:[#allocation5 + $0x150] sm:$0xff]
    %v211 = vld [vmem:[#allocation5 + $0x158] sm:$0xff]
    %v212 = vld [vmem:[#allocation5 + $0x160] sm:$0xff]
    %v213 = vld [vmem:[#allocation5 + $0x168] sm:$0xff]
    %v214 = vld [vmem:[#allocation5 + $0x170] sm:$0xff]
    %v215 = vld [vmem:[#allocation5 + $0x178] sm:$0xff]
    %v216 = vld [vmem:[#allocation5 + $0x180] sm:$0xff]
    %v217 = vld [vmem:[#allocation5 + $0x188] sm:$0xff]
    %v218 = vld [vmem:[#allocation5 + $0x190] sm:$0xff]
    %v219 = vld [vmem:[#allocation5 + $0x198] sm:$0xff]
    %v220 = vld [vmem:[#allocation5 + $0x1a0] sm:$0xff]
    %v221 = vld [vmem:[#allocation5 + $0x1a8] sm:$0xff]
    %v222 = vld [vmem:[#allocation5 + $0x1b0] sm:$0xff]
    %v223 = vld [vmem:[#allocation5 + $0x1b8] sm:$0xff]
    %v224 = vld [vmem:[#allocation5 + $0x1c0] sm:$0xff]
    %v225 = vld [vmem:[#allocation5 + $0x1c8] sm:$0xff]
    %v226 = vld [vmem:[#allocation5 + $0x1d0] sm:$0xff]
    %v227 = vld [vmem:[#allocation5 + $0x1d8] sm:$0xff]
    %v228 = vld [vmem:[#allocation5 + $0x1e0] sm:$0xff]
    %v229 = vld [vmem:[#allocation5 + $0x1e8] sm:$0xff]
    %v230 = vld [vmem:[#allocation5 + $0x1f0] sm:$0xff]
    %v231 = vld [vmem:[#allocation5 + $0x1f8] sm:$0xff]
    %v232 = vld [vmem:[#allocation5 + $0x200] sm:$0xff]
    %v233 = vld [vmem:[#allocation5 + $0x208] sm:$0xff]
    %v234 = vld [vmem:[#allocation5 + $0x210] sm:$0xff]
    %v235 = vld [vmem:[#allocation5 + $0x218] sm:$0xff]
    %v236 = vld [vmem:[#allocation5 + $0x220] sm:$0xff]
    %v237 = vld [vmem:[#allocation5 + $0x228] sm:$0xff]
    %v238 = vld [vmem:[#allocation5 + $0x230] sm:$0xff]
    %v239 = vld [vmem:[#allocation5 + $0x238] sm:$0xff]
    %v240 = vld [vmem:[#allocation5 + $0x240] sm:$0xff]
    %v241 = vld [vmem:[#allocation5 + $0x248] sm:$0xff]
    %v242 = vld [vmem:[#allocation5 + $0x250] sm:$0xff]
    %v243 = vld [vmem:[#allocation5 + $0x258] sm:$0xff]
    %v244 = vld [vmem:[#allocation5 + $0x260] sm:$0xff]
    %v245 = vld [vmem:[#allocation5 + $0x268] sm:$0xff]
    %v246 = vld [vmem:[#allocation5 + $0x270] sm:$0xff]
    %v247 = vld [vmem:[#allocation5 + $0x278] sm:$0xff]
    %v248 = vld [vmem:[#allocation5 + $0x280] sm:$0xff]
    %v249 = vld [vmem:[#allocation5 + $0x288] sm:$0xff]
    %v250 = vld [vmem:[#allocation5 + $0x290] sm:$0xff]
    %v251 = vld [vmem:[#allocation5 + $0x298] sm:$0xff]
    %v252 = vld [vmem:[#allocation5 + $0x2a0] sm:$0xff]
    %v253 = vld [vmem:[#allocation5 + $0x2a8] sm:$0xff]
    %v254 = vld [vmem:[#allocation5 + $0x2b0] sm:$0xff]
    %v255 = vld [vmem:[#allocation5 + $0x2b8] sm:$0xff]
    %v256 = vld [vmem:[#allocation5 + $0x2c0] sm:$0xff]
    %v257 = vld [vmem:[#allocation5 + $0x2c8] sm:$0xff]
    %v258 = vld [vmem:[#allocation5 + $0x2d0] sm:$0xff]
    %v259 = vld [vmem:[#allocation5 + $0x2d8] sm:$0xff]
    %v260 = vld [vmem:[#allocation5 + $0x2e0] sm:$0xff]
    %v261 = vld [vmem:[#allocation5 + $0x2e8] sm:$0xff]
    %v262 = vld [vmem:[#allocation5 + $0x2f0] sm:$0xff]
    %v263 = vld [vmem:[#allocation5 + $0x2f8] sm:$0xff]
    %v264 = vld [vmem:[#allocation5 + $0x300] sm:$0xff]
    %v265 = vld [vmem:[#allocation5 + $0x308] sm:$0xff]
    %v266 = vld [vmem:[#allocation5 + $0x310] sm:$0xff]
    %v267 = vld [vmem:[#allocation5 + $0x318] sm:$0xff]
    %v268 = vld [vmem:[#allocation5 + $0x320] sm:$0xff]
    %v269 = vld [vmem:[#allocation5 + $0x328] sm:$0xff]
    %v270 = vld [vmem:[#allocation5 + $0x330] sm:$0xff]
    %v271 = vld [vmem:[#allocation5 + $0x338] sm:$0xff]
    %v272 = vld [vmem:[#allocation5 + $0x340] sm:$0xff]
    %v273 = vld [vmem:[#allocation5 + $0x348] sm:$0xff]
    %v274 = vld [vmem:[#allocation5 + $0x350] sm:$0xff]
    %v275 = vld [vmem:[#allocation5 + $0x358] sm:$0xff]
    %v276 = vld [vmem:[#allocation5 + $0x360] sm:$0xff]
    %v277 = vld [vmem:[#allocation5 + $0x368] sm:$0xff]
    %v278 = vld [vmem:[#allocation5 + $0x370] sm:$0xff]
    %v279 = vld [vmem:[#allocation5 + $0x378] sm:$0xff]
    %v280 = vld [vmem:[#allocation5 + $0x380] sm:$0xff]
    %v281 = vld [vmem:[#allocation5 + $0x388] sm:$0xff]
    %v282 = vld [vmem:[#allocation5 + $0x390] sm:$0xff]
    %v283 = vld [vmem:[#allocation5 + $0x398] sm:$0xff]
    %v284 = vld [vmem:[#allocation5 + $0x3a0] sm:$0xff]
    %v285 = vld [vmem:[#allocation5 + $0x3a8] sm:$0xff]
    %v286 = vld [vmem:[#allocation5 + $0x3b0] sm:$0xff]
    %v287 = vld [vmem:[#allocation5 + $0x3b8] sm:$0xff]
    %v288 = vld [vmem:[#allocation5 + $0x3c0] sm:$0xff]
    %v289 = vld [vmem:[#allocation5 + $0x3c8] sm:$0xff]
    %v290 = vld [vmem:[#allocation5 + $0x3d0] sm:$0xff]
    %v291 = vld [vmem:[#allocation5 + $0x3d8] sm:$0xff]
    %v292 = vld [vmem:[#allocation5 + $0x3e0] sm:$0xff]
    %v293 = vld [vmem:[#allocation5 + $0x3e8] sm:$0xff]
    %v294 = vld [vmem:[#allocation5 + $0x3f0] sm:$0xff]
    %v295 = vld [vmem:[#allocation5 + $0x3f8] sm:$0xff]
    %v296 = vld [vmem:[#allocation5 + $0x400] sm:$0xff]
    %v297 = vld [vmem:[#allocation5 + $0x408] sm:$0xff]
    %v298 = vld [vmem:[#allocation5 + $0x410] sm:$0xff]
    %v299 = vld [vmem:[#allocation5 + $0x418] sm:$0xff]
    %v300 = vld [vmem:[#allocation5 + $0x420] sm:$0xff]
    %v301 = vld [vmem:[#allocation5 + $0x428] sm:$0xff]
    %v302 = vld [vmem:[#allocation5 + $0x430] sm:$0xff]
    %v303 = vld [vmem:[#allocation5 + $0x438] sm:$0xff]
    %v304 = vld [vmem:[#allocation5 + $0x440] sm:$0xff]
    %v305 = vld [vmem:[#allocation5 + $0x448] sm:$0xff]
    %v306 = vld [vmem:[#allocation5 + $0x450] sm:$0xff]
    %v307 = vld [vmem:[#allocation5 + $0x458] sm:$0xff]
    %v308 = vld [vmem:[#allocation5 + $0x460] sm:$0xff]
    %v309 = vld [vmem:[#allocation5 + $0x468] sm:$0xff]
    %v310 = vld [vmem:[#allocation5 + $0x470] sm:$0xff]
    %v311 = vld [vmem:[#allocation5 + $0x478] sm:$0xff]
    %v312 = vld [vmem:[#allocation5 + $0x480] sm:$0xff]
    %v313 = vld [vmem:[#allocation5 + $0x488] sm:$0xff]
    %v314 = vld [vmem:[#allocation5 + $0x490] sm:$0xff]
    %v315 = vld [vmem:[#allocation5 + $0x498] sm:$0xff]
    %v316 = vld [vmem:[#allocation5 + $0x4a0] sm:$0xff]
    %v317 = vld [vmem:[#allocation5 + $0x4a8] sm:$0xff]
    %v318 = vld [vmem:[#allocation5 + $0x4b0] sm:$0xff]
    %v319 = vld [vmem:[#allocation5 + $0x4b8] sm:$0xff]
    %v320 = vld [vmem:[#allocation5 + $0x4c0] sm:$0xff]
    %v321 = vld [vmem:[#allocation5 + $0x4c8] sm:$0xff]
    %v322 = vld [vmem:[#allocation5 + $0x4d0] sm:$0xff]
    %v323 = vld [vmem:[#allocation5 + $0x4d8] sm:$0xff]
    %v324 = vld [vmem:[#allocation5 + $0x4e0] sm:$0xff]
    %v325 = vld [vmem:[#allocation5 + $0x4e8] sm:$0xff]
    %v326 = vld [vmem:[#allocation5 + $0x4f0] sm:$0xff]
    %v327 = vld [vmem:[#allocation5 + $0x4f8] sm:$0xff]
    %v328 = vld [vmem:[#allocation5 + $0x500] sm:$0xff]
    %v329 = vld [vmem:[#allocation5 + $0x508] sm:$0xff]
    %v330 = vld [vmem:[#allocation5 + $0x510] sm:$0xff]
    %v331 = vld [vmem:[#allocation5 + $0x518] sm:$0xff]
    %v332 = vld [vmem:[#allocation5 + $0x520] sm:$0xff]
    %v333 = vld [vmem:[#allocation5 + $0x528] sm:$0xff]
    %v334 = vld [vmem:[#allocation5 + $0x530] sm:$0xff]
    %v335 = vld [vmem:[#allocation5 + $0x538] sm:$0xff]
    %v336 = vld [vmem:[#allocation5 + $0x540] sm:$0xff]
    %v337 = vld [vmem:[#allocation5 + $0x548] sm:$0xff]
    %v338 = vld [vmem:[#allocation5 + $0x550] sm:$0xff]
    %v339 = vld [vmem:[#allocation5 + $0x558] sm:$0xff]
    %v340 = vld [vmem:[#allocation5 + $0x560] sm:$0xff]
    %v341 = vld [vmem:[#allocation5 + $0x568] sm:$0xff]
    %v342 = vld [vmem:[#allocation5 + $0x570] sm:$0xff]
    %v343 = vld [vmem:[#allocation5 + $0x578] sm:$0xff]
    %v344 = vld [vmem:[#allocation5 + $0x580] sm:$0xff]
    %v345 = vld [vmem:[#allocation5 + $0x588] sm:$0xff]
    %v346 = vld [vmem:[#allocation5 + $0x590] sm:$0xff]
    %v347 = vld [vmem:[#allocation5 + $0x598] sm:$0xff]
    %v348 = vld [vmem:[#allocation5 + $0x5a0] sm:$0xff]
    %v349 = vld [vmem:[#allocation5 + $0x5a8] sm:$0xff]
    %v350 = vld [vmem:[#allocation5 + $0x5b0] sm:$0xff]
    %v351 = vld [vmem:[#allocation5 + $0x5b8] sm:$0xff]
    %v352 = vld [vmem:[#allocation5 + $0x5c0] sm:$0xff]
    %v353 = vld [vmem:[#allocation5 + $0x5c8] sm:$0xff]
    %v354 = vld [vmem:[#allocation5 + $0x5d0] sm:$0xff]
    %v355 = vld [vmem:[#allocation5 + $0x5d8] sm:$0xff]
    %v356 = vld [vmem:[#allocation5 + $0x5e0] sm:$0xff]
    %v357 = vld [vmem:[#allocation5 + $0x5e8] sm:$0xff]
    %v358 = vld [vmem:[#allocation5 + $0x5f0] sm:$0xff]
    %v359 = vld [vmem:[#allocation5 + $0x5f8] sm:$0xff]
    %v360 = vld [vmem:[#allocation5 + $0x600] sm:$0xff]
    %v361 = vld [vmem:[#allocation5 + $0x608] sm:$0xff]
    %v362 = vld [vmem:[#allocation5 + $0x610] sm:$0xff]
    %v363 = vld [vmem:[#allocation5 + $0x618] sm:$0xff]
    %v364 = vld [vmem:[#allocation5 + $0x620] sm:$0xff]
    %v365 = vld [vmem:[#allocation5 + $0x628] sm:$0xff]
    %v366 = vld [vmem:[#allocation5 + $0x630] sm:$0xff]
    %v367 = vld [vmem:[#allocation5 + $0x638] sm:$0xff]
    %v368 = vld [vmem:[#allocation5 + $0x640] sm:$0xff]
    %v369 = vld [vmem:[#allocation5 + $0x648] sm:$0xff]
    %v370 = vld [vmem:[#allocation5 + $0x650] sm:$0xff]
    %v371 = vld [vmem:[#allocation5 + $0x658] sm:$0xff]
    %v372 = vld [vmem:[#allocation5 + $0x660] sm:$0xff]
    %v373 = vld [vmem:[#allocation5 + $0x668] sm:$0xff]
    %v374 = vld [vmem:[#allocation5 + $0x670] sm:$0xff]
    %v375 = vld [vmem:[#allocation5 + $0x678] sm:$0xff]
    %v376 = vld [vmem:[#allocation5 + $0x680] sm:$0xff]
    %v377 = vld [vmem:[#allocation5 + $0x688] sm:$0xff]
    %v378 = vld [vmem:[#allocation5 + $0x690] sm:$0xff]
    %v379 = vld [vmem:[#allocation5 + $0x698] sm:$0xff]
    %v380 = vld [vmem:[#allocation5 + $0x6a0] sm:$0xff]
    %v381 = vld [vmem:[#allocation5 + $0x6a8] sm:$0xff]
    %v382 = vld [vmem:[#allocation5 + $0x6b0] sm:$0xff]
    %v383 = vld [vmem:[#allocation5 + $0x6b8] sm:$0xff]
    %v384 = vld [vmem:[#allocation5 + $0x6c0] sm:$0xff]
    %v385 = vld [vmem:[#allocation5 + $0x6c8] sm:$0xff]
    %v386 = vld [vmem:[#allocation5 + $0x6d0] sm:$0xff]
    %v387 = vld [vmem:[#allocation5 + $0x6d8] sm:$0xff]
    %v388 = vld [vmem:[#allocation5 + $0x6e0] sm:$0xff]
    %v389 = vld [vmem:[#allocation5 + $0x6e8] sm:$0xff]
    %v390 = vld [vmem:[#allocation5 + $0x6f0] sm:$0xff]
    %v391 = vld [vmem:[#allocation5 + $0x6f8] sm:$0xff]
    %v392 = vld [vmem:[#allocation5 + $0x700] sm:$0xff]
    %v393 = vld [vmem:[#allocation5 + $0x708] sm:$0xff]
    %v394 = vld [vmem:[#allocation5 + $0x710] sm:$0xff]
    %v395 = vld [vmem:[#allocation5 + $0x718] sm:$0xff]
    %v396 = vld [vmem:[#allocation5 + $0x720] sm:$0xff]
    %v397 = vld [vmem:[#allocation5 + $0x728] sm:$0xff]
    %v398 = vld [vmem:[#allocation5 + $0x730] sm:$0xff]
    %v399 = vld [vmem:[#allocation5 + $0x738] sm:$0xff]
    %v400 = vld [vmem:[#allocation5 + $0x740] sm:$0xff]
    %v401 = vld [vmem:[#allocation5 + $0x748] sm:$0xff]
    %v402 = vld [vmem:[#allocation5 + $0x750] sm:$0xff]
    %v403 = vld [vmem:[#allocation5 + $0x758] sm:$0xff]
    %v404 = vld [vmem:[#allocation5 + $0x760] sm:$0xff]
    %v405 = vld [vmem:[#allocation5 + $0x768] sm:$0xff]
    %v406 = vld [vmem:[#allocation5 + $0x770] sm:$0xff]
    %v407 = vld [vmem:[#allocation5 + $0x778] sm:$0xff]
    %v408 = vld [vmem:[#allocation5 + $0x780] sm:$0xff]
    %v409 = vld [vmem:[#allocation5 + $0x788] sm:$0xff]
    %v410 = vld [vmem:[#allocation5 + $0x790] sm:$0xff]
    %v411 = vld [vmem:[#allocation5 + $0x798] sm:$0xff]
    %v412 = vld [vmem:[#allocation5 + $0x7a0] sm:$0xff]
    %v413 = vld [vmem:[#allocation5 + $0x7a8] sm:$0xff]
    %v414 = vld [vmem:[#allocation5 + $0x7b0] sm:$0xff]
    %v415 = vld [vmem:[#allocation5 + $0x7b8] sm:$0xff]
    %v416 = vld [vmem:[#allocation5 + $0x7c0] sm:$0xff]
    %v417 = vld [vmem:[#allocation5 + $0x7c8] sm:$0xff]
    %v418 = vld [vmem:[#allocation5 + $0x7d0] sm:$0xff]
    %v419 = vld [vmem:[#allocation5 + $0x7d8] sm:$0xff]
    %v420 = vld [vmem:[#allocation5 + $0x7e0] sm:$0xff]
    %v421 = vld [vmem:[#allocation5 + $0x7e8] sm:$0xff]
    %v422 = vld [vmem:[#allocation5 + $0x7f0] sm:$0xff]
    %v423 = vld [vmem:[#allocation5 + $0x7f8] sm:$0xff]
    %424 = vmatprep.subr.mxu0 %v229
    %425 = vmatpush1.msra.mxu0 %v228
    %426 = vmatprep.subr.mxu0 %v225
    %427 = vmatpush1.msra.mxu0 %v224
    %428 = vmatprep.subr.mxu0 %v221
    %429 = vmatpush1.msra.mxu0 %v220
    %430 = vmatprep.subr.mxu0 %v217
    %431 = vmatpush1.msra.mxu0 %v216
    %432 = vmatprep.subr.mxu0 %v213
    %433 = vmatpush1.msra.mxu0 %v212
    %434 = vmatprep.subr.mxu0 %v209
    %435 = vmatpush1.msra.mxu0 %v208
    %436 = vmatprep.subr.mxu0 %v205
    %437 = vmatpush1.msra.mxu0 %v204
    %438 = vmatprep.subr.mxu0 %v201
    %439 = vmatpush1.msra.mxu0 %v200
    %440 = vmatprep.subr.mxu0 %v197
    %441 = vmatpush1.msra.mxu0 %v196
    %442 = vmatprep.subr.mxu0 %v193
    %443 = vmatpush1.msra.mxu0 %v192
    %444 = vmatprep.subr.mxu0 %v189
    %445 = vmatpush1.msra.mxu0 %v188
    %446 = vmatprep.subr.mxu0 %v185
    %447 = vmatpush1.msra.mxu0 %v184
    %448 = vmatprep.subr.mxu0 %v181
    %449 = vmatpush1.msra.mxu0 %v180
    %450 = vmatprep.subr.mxu0 %v177
    %451 = vmatpush1.msra.mxu0 %v176
    %452 = vmatprep.subr.mxu0 %v173
    %453 = vmatpush1.msra.mxu0 %v172
    %454 = vmatprep.subr.mxu0 %v169
    %455 = vmatpush1.msra.mxu0 %v168
    %456 = vmatprep.subr.mxu0 %v293
    %457 = vmatpush2.msra.mxu0 %v292
    %458 = vmatprep.subr.mxu0 %v289
    %459 = vmatpush2.msra.mxu0 %v288
    %460 = vmatprep.subr.mxu0 %v285
    %461 = vmatpush2.msra.mxu0 %v284
    %462 = vmatprep.subr.mxu0 %v281
    %463 = vmatpush2.msra.mxu0 %v280
    %464 = vmatprep.subr.mxu0 %v277
    %465 = vmatpush2.msra.mxu0 %v276
    %466 = vmatprep.subr.mxu0 %v273
    %467 = vmatpush2.msra.mxu0 %v272
    %468 = vmatprep.subr.mxu0 %v269
    %469 = vmatpush2.msra.mxu0 %v268
    %470 = vmatprep.subr.mxu0 %v265
    %471 = vmatpush2.msra.mxu0 %v264
    %472 = vmatprep.subr.mxu0 %v261
    %473 = vmatpush2.msra.mxu0 %v260
    %474 = vmatprep.subr.mxu0 %v257
    %475 = vmatpush2.msra.mxu0 %v256
    %476 = vmatprep.subr.mxu0 %v253
    %477 = vmatpush2.msra.mxu0 %v252
    %478 = vmatprep.subr.mxu0 %v249
    %479 = vmatpush2.msra.mxu0 %v248
    %480 = vmatprep.subr.mxu0 %v245
    %481 = vmatpush2.msra.mxu0 %v244
    %482 = vmatprep.subr.mxu0 %v241
    %483 = vmatpush2.msra.mxu0 %v240
    %484 = vmatprep.subr.mxu0 %v237
    %485 = vmatpush2.msra.mxu0 %v236
    %486 = vmatprep.subr.mxu0 %v233
    %487 = vmatpush2.msra.mxu0 %v232
    %488 = vmatprep.mubr.f32.mxu0 %v41
    %489 = vmatmul.mubr.f32.gmra.mxu0 %v40
    %v490 = vpop.f32.mrf.mxu0
    %v491 = vadd.f32 0.0, %v490
    %v492 = vpop.f32.mrf.mxu0
    %v493 = vadd.f32 0.0, %v492
    %494 = vmatprep.mubr.f32.mxu0 %v45
    %495 = vmatmul.mubr.f32.gmra.mxu0 %v44
    %v496 = vpop.f32.mrf.mxu0
    %v497 = vadd.f32 0.0, %v496
    %v498 = vpop.f32.mrf.mxu0
    %v499 = vadd.f32 0.0, %v498
    %500 = vmatprep.mubr.f32.mxu0 %v49
    %501 = vmatmul.mubr.f32.gmra.mxu0 %v48
    %v502 = vpop.f32.mrf.mxu0
    %v503 = vadd.f32 0.0, %v502
    %v504 = vpop.f32.mrf.mxu0
    %v505 = vadd.f32 0.0, %v504
    %506 = vmatprep.mubr.f32.mxu0 %v53
    %507 = vmatmul.mubr.f32.gmra.mxu0 %v52
    %v508 = vpop.f32.mrf.mxu0
    %v509 = vadd.f32 0.0, %v508
    %v510 = vpop.f32.mrf.mxu0
    %v511 = vadd.f32 0.0, %v510
    %512 = vmatprep.mubr.f32.mxu0 %v57
    %513 = vmatmul.mubr.f32.gmra.mxu0 %v56
    %v514 = vpop.f32.mrf.mxu0
    %v515 = vadd.f32 0.0, %v514
    %v516 = vpop.f32.mrf.mxu0
    %v517 = vadd.f32 0.0, %v516
    %518 = vmatprep.mubr.f32.mxu0 %v61
    %519 = vmatmul.mubr.f32.gmra.mxu0 %v60
    %v520 = vpop.f32.mrf.mxu0
    %v521 = vadd.f32 0.0, %v520
    %v522 = vpop.f32.mrf.mxu0
    %v523 = vadd.f32 0.0, %v522
    %524 = vmatprep.mubr.f32.mxu0 %v65
    %525 = vmatmul.mubr.f32.gmra.mxu0 %v64
    %v526 = vpop.f32.mrf.mxu0
    %v527 = vadd.f32 0.0, %v526
    %v528 = vpop.f32.mrf.mxu0
    %v529 = vadd.f32 0.0, %v528
    %530 = vmatprep.mubr.f32.mxu0 %v69
    %531 = vmatmul.mubr.f32.gmra.mxu0 %v68
    %v532 = vpop.f32.mrf.mxu0
    %v533 = vadd.f32 0.0, %v532
    %v534 = vpop.f32.mrf.mxu0
    %v535 = vadd.f32 0.0, %v534
    %536 = vmatprep.mubr.f32.mxu0 %v73
    %537 = vmatmul.mubr.f32.gmra.mxu0 %v72
    %v538 = vpop.f32.mrf.mxu0
    %v539 = vadd.f32 0.0, %v538
    %v540 = vpop.f32.mrf.mxu0
    %v541 = vadd.f32 0.0, %v540
    %542 = vmatprep.mubr.f32.mxu0 %v77
    %543 = vmatmul.mubr.f32.gmra.mxu0 %v76
    %v544 = vpop.f32.mrf.mxu0
    %v545 = vadd.f32 0.0, %v544
    %v546 = vpop.f32.mrf.mxu0
    %v547 = vadd.f32 0.0, %v546
    %548 = vmatprep.mubr.f32.mxu0 %v81
    %549 = vmatmul.mubr.f32.gmra.mxu0 %v80
    %v550 = vpop.f32.mrf.mxu0
    %v551 = vadd.f32 0.0, %v550
    %v552 = vpop.f32.mrf.mxu0
    %v553 = vadd.f32 0.0, %v552
    %554 = vmatprep.mubr.f32.mxu0 %v85
    %555 = vmatmul.mubr.f32.gmra.mxu0 %v84
    %v556 = vpop.f32.mrf.mxu0
    %v557 = vadd.f32 0.0, %v556
    %v558 = vpop.f32.mrf.mxu0
    %v559 = vadd.f32 0.0, %v558
    %560 = vmatprep.mubr.f32.mxu0 %v89
    %561 = vmatmul.mubr.f32.gmra.mxu0 %v88
    %v562 = vpop.f32.mrf.mxu0
    %v563 = vadd.f32 0.0, %v562
    %v564 = vpop.f32.mrf.mxu0
    %v565 = vadd.f32 0.0, %v564
    %566 = vmatprep.mubr.f32.mxu0 %v93
    %567 = vmatmul.mubr.f32.gmra.mxu0 %v92
    %v568 = vpop.f32.mrf.mxu0
    %v569 = vadd.f32 0.0, %v568
    %v570 = vpop.f32.mrf.mxu0
    %v571 = vadd.f32 0.0, %v570
    %572 = vmatprep.mubr.f32.mxu0 %v97
    %573 = vmatmul.mubr.f32.gmra.mxu0 %v96
    %v574 = vpop.f32.mrf.mxu0
    %v575 = vadd.f32 0.0, %v574
    %v576 = vpop.f32.mrf.mxu0
    %v577 = vadd.f32 0.0, %v576
    %578 = vmatprep.mubr.f32.mxu0 %v101
    %579 = vmatmul.mubr.f32.gmra.mxu0 %v100
    %v580 = vpop.f32.mrf.mxu0
    %v581 = vadd.f32 0.0, %v580
    %v582 = vpop.f32.mrf.mxu0
    %v583 = vadd.f32 0.0, %v582
    %584 = vmatprep.mubr.f32.mxu0 %v105
    %585 = vmatmul.mubr.f32.gmra.mxu0 %v104
    %v586 = vpop.f32.mrf.mxu0
    %v587 = vadd.f32 0.0, %v586
    %v588 = vpop.f32.mrf.mxu0
    %v589 = vadd.f32 0.0, %v588
    %590 = vmatprep.mubr.f32.mxu0 %v109
    %591 = vmatmul.mubr.f32.gmra.mxu0 %v108
    %v592 = vpop.f32.mrf.mxu0
    %v593 = vadd.f32 0.0, %v592
    %v594 = vpop.f32.mrf.mxu0
    %v595 = vadd.f32 0.0, %v594
    %596 = vmatprep.mubr.f32.mxu0 %v113
    %597 = vmatmul.mubr.f32.gmra.mxu0 %v112
    %v598 = vpop.f32.mrf.mxu0
    %v599 = vadd.f32 0.0, %v598
    %v600 = vpop.f32.mrf.mxu0
    %v601 = vadd.f32 0.0, %v600
    %602 = vmatprep.mubr.f32.mxu0 %v117
    %603 = vmatmul.mubr.f32.gmra.mxu0 %v116
    %v604 = vpop.f32.mrf.mxu0
    %v605 = vadd.f32 0.0, %v604
    %v606 = vpop.f32.mrf.mxu0
    %v607 = vadd.f32 0.0, %v606
    %608 = vmatprep.mubr.f32.mxu0 %v121
    %609 = vmatmul.mubr.f32.gmra.mxu0 %v120
    %v610 = vpop.f32.mrf.mxu0
    %v611 = vadd.f32 0.0, %v610
    %v612 = vpop.f32.mrf.mxu0
    %v613 = vadd.f32 0.0, %v612
    %614 = vmatprep.mubr.f32.mxu0 %v125
    %615 = vmatmul.mubr.f32.gmra.mxu0 %v124
    %v616 = vpop.f32.mrf.mxu0
    %v617 = vadd.f32 0.0, %v616
    %v618 = vpop.f32.mrf.mxu0
    %v619 = vadd.f32 0.0, %v618
    %620 = vmatprep.mubr.f32.mxu0 %v129
    %621 = vmatmul.mubr.f32.gmra.mxu0 %v128
    %v622 = vpop.f32.mrf.mxu0
    %v623 = vadd.f32 0.0, %v622
    %v624 = vpop.f32.mrf.mxu0
    %v625 = vadd.f32 0.0, %v624
    %626 = vmatprep.mubr.f32.mxu0 %v133
    %627 = vmatmul.mubr.f32.gmra.mxu0 %v132
    %v628 = vpop.f32.mrf.mxu0
    %v629 = vadd.f32 0.0, %v628
    %v630 = vpop.f32.mrf.mxu0
    %v631 = vadd.f32 0.0, %v630
    %632 = vmatprep.mubr.f32.mxu0 %v137
    %633 = vmatmul.mubr.f32.gmra.mxu0 %v136
    %v634 = vpop.f32.mrf.mxu0
    %v635 = vadd.f32 0.0, %v634
    %v636 = vpop.f32.mrf.mxu0
    %v637 = vadd.f32 0.0, %v636
    %638 = vmatprep.mubr.f32.mxu0 %v141
    %639 = vmatmul.mubr.f32.gmra.mxu0 %v140
    %v640 = vpop.f32.mrf.mxu0
    %v641 = vadd.f32 0.0, %v640
    %v642 = vpop.f32.mrf.mxu0
    %v643 = vadd.f32 0.0, %v642
    %644 = vmatprep.mubr.f32.mxu0 %v145
    %645 = vmatmul.mubr.f32.gmra.mxu0 %v144
    %v646 = vpop.f32.mrf.mxu0
    %v647 = vadd.f32 0.0, %v646
    %v648 = vpop.f32.mrf.mxu0
    %v649 = vadd.f32 0.0, %v648
    %650 = vmatprep.mubr.f32.mxu0 %v149
    %651 = vmatmul.mubr.f32.gmra.mxu0 %v148
    %v652 = vpop.f32.mrf.mxu0
    %v653 = vadd.f32 0.0, %v652
    %v654 = vpop.f32.mrf.mxu0
    %v655 = vadd.f32 0.0, %v654
    %656 = vmatprep.mubr.f32.mxu0 %v153
    %657 = vmatmul.mubr.f32.gmra.mxu0 %v152
    %v658 = vpop.f32.mrf.mxu0
    %v659 = vadd.f32 0.0, %v658
    %v660 = vpop.f32.mrf.mxu0
    %v661 = vadd.f32 0.0, %v660
    %662 = vmatprep.mubr.f32.mxu0 %v157
    %663 = vmatmul.mubr.f32.gmra.mxu0 %v156
    %v664 = vpop.f32.mrf.mxu0
    %v665 = vadd.f32 0.0, %v664
    %v666 = vpop.f32.mrf.mxu0
    %v667 = vadd.f32 0.0, %v666
    %668 = vmatprep.mubr.f32.mxu0 %v161
    %669 = vmatmul.mubr.f32.gmra.mxu0 %v160
    %v670 = vpop.f32.mrf.mxu0
    %v671 = vadd.f32 0.0, %v670
    %v672 = vpop.f32.mrf.mxu0
    %v673 = vadd.f32 0.0, %v672
    %674 = vmatprep.mubr.f32.mxu0 %v165
    %675 = vmatmul.mubr.f32.gmra.mxu0 %v164
    %v676 = vpop.f32.mrf.mxu0
    %v677 = vadd.f32 0.0, %v676
    %v678 = vpop.f32.mrf.mxu0
    %v679 = vadd.f32 0.0, %v678
    %680 = vdwg.mxu0
    %681 = vmatprep.subr.mxu0 %v357
    %682 = vmatpush1.msra.mxu0 %v356
    %683 = vmatprep.subr.mxu0 %v353
    %684 = vmatpush1.msra.mxu0 %v352
    %685 = vmatprep.subr.mxu0 %v349
    %686 = vmatpush1.msra.mxu0 %v348
    %687 = vmatprep.subr.mxu0 %v345
    %688 = vmatpush1.msra.mxu0 %v344
    %689 = vmatprep.subr.mxu0 %v341
    %690 = vmatpush1.msra.mxu0 %v340
    %691 = vmatprep.subr.mxu0 %v337
    %692 = vmatpush1.msra.mxu0 %v336
    %693 = vmatprep.subr.mxu0 %v333
    %694 = vmatpush1.msra.mxu0 %v332
    %695 = vmatprep.subr.mxu0 %v329
    %696 = vmatpush1.msra.mxu0 %v328
    %697 = vmatprep.subr.mxu0 %v325
    %698 = vmatpush1.msra.mxu0 %v324
    %699 = vmatprep.subr.mxu0 %v321
    %700 = vmatpush1.msra.mxu0 %v320
    %701 = vmatprep.subr.mxu0 %v317
    %702 = vmatpush1.msra.mxu0 %v316
    %703 = vmatprep.subr.mxu0 %v313
    %704 = vmatpush1.msra.mxu0 %v312
    %705 = vmatprep.subr.mxu0 %v309
    %706 = vmatpush1.msra.mxu0 %v308
    %707 = vmatprep.subr.mxu0 %v305
    %708 = vmatpush1.msra.mxu0 %v304
    %709 = vmatprep.subr.mxu0 %v301
    %710 = vmatpush1.msra.mxu0 %v300
    %711 = vmatprep.subr.mxu0 %v297
    %712 = vmatpush1.msra.mxu0 %v296
    %713 = vmatprep.subr.mxu0 %v421
    %714 = vmatpush2.msra.mxu0 %v420
    %715 = vmatprep.subr.mxu0 %v417
    %716 = vmatpush2.msra.mxu0 %v416
    %717 = vmatprep.subr.mxu0 %v413
    %718 = vmatpush2.msra.mxu0 %v412
    %719 = vmatprep.subr.mxu0 %v409
    %720 = vmatpush2.msra.mxu0 %v408
    %721 = vmatprep.subr.mxu0 %v405
    %722 = vmatpush2.msra.mxu0 %v404
    %723 = vmatprep.subr.mxu0 %v401
    %724 = vmatpush2.msra.mxu0 %v400
    %725 = vmatprep.subr.mxu0 %v397
    %726 = vmatpush2.msra.mxu0 %v396
    %727 = vmatprep.subr.mxu0 %v393
    %728 = vmatpush2.msra.mxu0 %v392
    %729 = vmatprep.subr.mxu0 %v389
    %730 = vmatpush2.msra.mxu0 %v388
    %731 = vmatprep.subr.mxu0 %v385
    %732 = vmatpush2.msra.mxu0 %v384
    %733 = vmatprep.subr.mxu0 %v381
    %734 = vmatpush2.msra.mxu0 %v380
    %735 = vmatprep.subr.mxu0 %v377
    %736 = vmatpush2.msra.mxu0 %v376
    %737 = vmatprep.subr.mxu0 %v373
    %738 = vmatpush2.msra.mxu0 %v372
    %739 = vmatprep.subr.mxu0 %v369
    %740 = vmatpush2.msra.mxu0 %v368
    %741 = vmatprep.subr.mxu0 %v365
    %742 = vmatpush2.msra.mxu0 %v364
    %743 = vmatprep.subr.mxu0 %v361
    %744 = vmatpush2.msra.mxu0 %v360
    %745 = vmatprep.mubr.f32.mxu0 %v43
    %746 = vmatmul.mubr.f32.gmra.mxu0 %v42
    %v747 = vpop.f32.mrf.mxu0
    %v748 = vadd.f32 %v491, %v747
    %v749 = vpop.f32.mrf.mxu0
    %v750 = vadd.f32 %v493, %v749
    %751 = vmatprep.mubr.f32.mxu0 %v47
    %752 = vmatmul.mubr.f32.gmra.mxu0 %v46
    %v753 = vpop.f32.mrf.mxu0
    %v754 = vadd.f32 %v497, %v753
    %v755 = vpop.f32.mrf.mxu0
    %v756 = vadd.f32 %v499, %v755
    %757 = vmatprep.mubr.f32.mxu0 %v51
    %758 = vmatmul.mubr.f32.gmra.mxu0 %v50
    %v759 = vpop.f32.mrf.mxu0
    %v760 = vadd.f32 %v503, %v759
    %v761 = vpop.f32.mrf.mxu0
    %v762 = vadd.f32 %v505, %v761
    %763 = vmatprep.mubr.f32.mxu0 %v55
    %764 = vmatmul.mubr.f32.gmra.mxu0 %v54
    %v765 = vpop.f32.mrf.mxu0
    %v766 = vadd.f32 %v509, %v765
    %v767 = vpop.f32.mrf.mxu0
    %v768 = vadd.f32 %v511, %v767
    %769 = vmatprep.mubr.f32.mxu0 %v59
    %770 = vmatmul.mubr.f32.gmra.mxu0 %v58
    %v771 = vpop.f32.mrf.mxu0
    %v772 = vadd.f32 %v515, %v771
    %v773 = vpop.f32.mrf.mxu0
    %v774 = vadd.f32 %v517, %v773
    %775 = vmatprep.mubr.f32.mxu0 %v63
    %776 = vmatmul.mubr.f32.gmra.mxu0 %v62
    %v777 = vpop.f32.mrf.mxu0
    %v778 = vadd.f32 %v521, %v777
    %v779 = vpop.f32.mrf.mxu0
    %v780 = vadd.f32 %v523, %v779
    %781 = vmatprep.mubr.f32.mxu0 %v67
    %782 = vmatmul.mubr.f32.gmra.mxu0 %v66
    %v783 = vpop.f32.mrf.mxu0
    %v784 = vadd.f32 %v527, %v783
    %v785 = vpop.f32.mrf.mxu0
    %v786 = vadd.f32 %v529, %v785
    %787 = vmatprep.mubr.f32.mxu0 %v71
    %788 = vmatmul.mubr.f32.gmra.mxu0 %v70
    %v789 = vpop.f32.mrf.mxu0
    %v790 = vadd.f32 %v533, %v789
    %v791 = vpop.f32.mrf.mxu0
    %v792 = vadd.f32 %v535, %v791
    %793 = vmatprep.mubr.f32.mxu0 %v75
    %794 = vmatmul.mubr.f32.gmra.mxu0 %v74
    %v795 = vpop.f32.mrf.mxu0
    %v796 = vadd.f32 %v539, %v795
    %v797 = vpop.f32.mrf.mxu0
    %v798 = vadd.f32 %v541, %v797
    %799 = vmatprep.mubr.f32.mxu0 %v79
    %800 = vmatmul.mubr.f32.gmra.mxu0 %v78
    %v801 = vpop.f32.mrf.mxu0
    %v802 = vadd.f32 %v545, %v801
    %v803 = vpop.f32.mrf.mxu0
    %v804 = vadd.f32 %v547, %v803
    %805 = vmatprep.mubr.f32.mxu0 %v83
    %806 = vmatmul.mubr.f32.gmra.mxu0 %v82
    %v807 = vpop.f32.mrf.mxu0
    %v808 = vadd.f32 %v551, %v807
    %v809 = vpop.f32.mrf.mxu0
    %v810 = vadd.f32 %v553, %v809
    %811 = vmatprep.mubr.f32.mxu0 %v87
    %812 = vmatmul.mubr.f32.gmra.mxu0 %v86
    %v813 = vpop.f32.mrf.mxu0
    %v814 = vadd.f32 %v557, %v813
    %v815 = vpop.f32.mrf.mxu0
    %v816 = vadd.f32 %v559, %v815
    %817 = vmatprep.mubr.f32.mxu0 %v91
    %818 = vmatmul.mubr.f32.gmra.mxu0 %v90
    %v819 = vpop.f32.mrf.mxu0
    %v820 = vadd.f32 %v563, %v819
    %v821 = vpop.f32.mrf.mxu0
    %v822 = vadd.f32 %v565, %v821
    %823 = vmatprep.mubr.f32.mxu0 %v95
    %824 = vmatmul.mubr.f32.gmra.mxu0 %v94
    %v825 = vpop.f32.mrf.mxu0
    %v826 = vadd.f32 %v569, %v825
    %v827 = vpop.f32.mrf.mxu0
    %v828 = vadd.f32 %v571, %v827
    %829 = vmatprep.mubr.f32.mxu0 %v99
    %830 = vmatmul.mubr.f32.gmra.mxu0 %v98
    %v831 = vpop.f32.mrf.mxu0
    %v832 = vadd.f32 %v575, %v831
    %v833 = vpop.f32.mrf.mxu0
    %v834 = vadd.f32 %v577, %v833
    %835 = vmatprep.mubr.f32.mxu0 %v103
    %836 = vmatmul.mubr.f32.gmra.mxu0 %v102
    %v837 = vpop.f32.mrf.mxu0
    %v838 = vadd.f32 %v581, %v837
    %v839 = vpop.f32.mrf.mxu0
    %v840 = vadd.f32 %v583, %v839
    %841 = vmatprep.mubr.f32.mxu0 %v107
    %842 = vmatmul.mubr.f32.gmra.mxu0 %v106
    %v843 = vpop.f32.mrf.mxu0
    %v844 = vadd.f32 %v587, %v843
    %v845 = vpop.f32.mrf.mxu0
    %v846 = vadd.f32 %v589, %v845
    %847 = vmatprep.mubr.f32.mxu0 %v111
    %848 = vmatmul.mubr.f32.gmra.mxu0 %v110
    %v849 = vpop.f32.mrf.mxu0
    %v850 = vadd.f32 %v593, %v849
    %v851 = vpop.f32.mrf.mxu0
    %v852 = vadd.f32 %v595, %v851
    %853 = vmatprep.mubr.f32.mxu0 %v115
    %854 = vmatmul.mubr.f32.gmra.mxu0 %v114
    %v855 = vpop.f32.mrf.mxu0
    %v856 = vadd.f32 %v599, %v855
    %v857 = vpop.f32.mrf.mxu0
    %v858 = vadd.f32 %v601, %v857
    %859 = vmatprep.mubr.f32.mxu0 %v119
    %860 = vmatmul.mubr.f32.gmra.mxu0 %v118
    %v861 = vpop.f32.mrf.mxu0
    %v862 = vadd.f32 %v605, %v861
    %v863 = vpop.f32.mrf.mxu0
    %v864 = vadd.f32 %v607, %v863
    %865 = vmatprep.mubr.f32.mxu0 %v123
    %866 = vmatmul.mubr.f32.gmra.mxu0 %v122
    %v867 = vpop.f32.mrf.mxu0
    %v868 = vadd.f32 %v611, %v867
    %v869 = vpop.f32.mrf.mxu0
    %v870 = vadd.f32 %v613, %v869
    %871 = vmatprep.mubr.f32.mxu0 %v127
    %872 = vmatmul.mubr.f32.gmra.mxu0 %v126
    %v873 = vpop.f32.mrf.mxu0
    %v874 = vadd.f32 %v617, %v873
    %v875 = vpop.f32.mrf.mxu0
    %v876 = vadd.f32 %v619, %v875
    %877 = vmatprep.mubr.f32.mxu0 %v131
    %878 = vmatmul.mubr.f32.gmra.mxu0 %v130
    %v879 = vpop.f32.mrf.mxu0
    %v880 = vadd.f32 %v623, %v879
    %v881 = vpop.f32.mrf.mxu0
    %v882 = vadd.f32 %v625, %v881
    %883 = vmatprep.mubr.f32.mxu0 %v135
    %884 = vmatmul.mubr.f32.gmra.mxu0 %v134
    %v885 = vpop.f32.mrf.mxu0
    %v886 = vadd.f32 %v629, %v885
    %v887 = vpop.f32.mrf.mxu0
    %v888 = vadd.f32 %v631, %v887
    %889 = vmatprep.mubr.f32.mxu0 %v139
    %890 = vmatmul.mubr.f32.gmra.mxu0 %v138
    %v891 = vpop.f32.mrf.mxu0
    %v892 = vadd.f32 %v635, %v891
    %v893 = vpop.f32.mrf.mxu0
    %v894 = vadd.f32 %v637, %v893
    %895 = vmatprep.mubr.f32.mxu0 %v143
    %896 = vmatmul.mubr.f32.gmra.mxu0 %v142
    %v897 = vpop.f32.mrf.mxu0
    %v898 = vadd.f32 %v641, %v897
    %v899 = vpop.f32.mrf.mxu0
    %v900 = vadd.f32 %v643, %v899
    %901 = vmatprep.mubr.f32.mxu0 %v147
    %902 = vmatmul.mubr.f32.gmra.mxu0 %v146
    %v903 = vpop.f32.mrf.mxu0
    %v904 = vadd.f32 %v647, %v903
    %v905 = vpop.f32.mrf.mxu0
    %v906 = vadd.f32 %v649, %v905
    %907 = vmatprep.mubr.f32.mxu0 %v151
    %908 = vmatmul.mubr.f32.gmra.mxu0 %v150
    %v909 = vpop.f32.mrf.mxu0
    %v910 = vadd.f32 %v653, %v909
    %v911 = vpop.f32.mrf.mxu0
    %v912 = vadd.f32 %v655, %v911
    %913 = vmatprep.mubr.f32.mxu0 %v155
    %914 = vmatmul.mubr.f32.gmra.mxu0 %v154
    %v915 = vpop.f32.mrf.mxu0
    %v916 = vadd.f32 %v659, %v915
    %v917 = vpop.f32.mrf.mxu0
    %v918 = vadd.f32 %v661, %v917
    %919 = vmatprep.mubr.f32.mxu0 %v159
    %920 = vmatmul.mubr.f32.gmra.mxu0 %v158
    %v921 = vpop.f32.mrf.mxu0
    %v922 = vadd.f32 %v665, %v921
    %v923 = vpop.f32.mrf.mxu0
    %v924 = vadd.f32 %v667, %v923
    %925 = vmatprep.mubr.f32.mxu0 %v163
    %926 = vmatmul.mubr.f32.gmra.mxu0 %v162
    %v927 = vpop.f32.mrf.mxu0
    %v928 = vadd.f32 %v671, %v927
    %v929 = vpop.f32.mrf.mxu0
    %v930 = vadd.f32 %v673, %v929
    %931 = vmatprep.mubr.f32.mxu0 %v167
    %932 = vmatmul.mubr.f32.gmra.mxu0 %v166
    %v933 = vpop.f32.mrf.mxu0
    %v934 = vadd.f32 %v677, %v933
    %v935 = vpop.f32.mrf.mxu0
    %v936 = vadd.f32 %v679, %v935
    %937 = vdwg.mxu0
    %938 = vmatprep.subr.mxu0 %v231
    %939 = vmatpush1.msra.mxu0 %v230
    %940 = vmatprep.subr.mxu0 %v227
    %941 = vmatpush1.msra.mxu0 %v226
    %942 = vmatprep.subr.mxu0 %v223
    %943 = vmatpush1.msra.mxu0 %v222
    %944 = vmatprep.subr.mxu0 %v219
    %945 = vmatpush1.msra.mxu0 %v218
    %946 = vmatprep.subr.mxu0 %v215
    %947 = vmatpush1.msra.mxu0 %v214
    %948 = vmatprep.subr.mxu0 %v211
    %949 = vmatpush1.msra.mxu0 %v210
    %950 = vmatprep.subr.mxu0 %v207
    %951 = vmatpush1.msra.mxu0 %v206
    %952 = vmatprep.subr.mxu0 %v203
    %953 = vmatpush1.msra.mxu0 %v202
    %954 = vmatprep.subr.mxu0 %v199
    %955 = vmatpush1.msra.mxu0 %v198
    %956 = vmatprep.subr.mxu0 %v195
    %957 = vmatpush1.msra.mxu0 %v194
    %958 = vmatprep.subr.mxu0 %v191
    %959 = vmatpush1.msra.mxu0 %v190
    %960 = vmatprep.subr.mxu0 %v187
    %961 = vmatpush1.msra.mxu0 %v186
    %962 = vmatprep.subr.mxu0 %v183
    %963 = vmatpush1.msra.mxu0 %v182
    %964 = vmatprep.subr.mxu0 %v179
    %965 = vmatpush1.msra.mxu0 %v178
    %966 = vmatprep.subr.mxu0 %v175
    %967 = vmatpush1.msra.mxu0 %v174
    %968 = vmatprep.subr.mxu0 %v171
    %969 = vmatpush1.msra.mxu0 %v170
    %970 = vmatprep.subr.mxu0 %v295
    %971 = vmatpush2.msra.mxu0 %v294
    %972 = vmatprep.subr.mxu0 %v291
    %973 = vmatpush2.msra.mxu0 %v290
    %974 = vmatprep.subr.mxu0 %v287
    %975 = vmatpush2.msra.mxu0 %v286
    %976 = vmatprep.subr.mxu0 %v283
    %977 = vmatpush2.msra.mxu0 %v282
    %978 = vmatprep.subr.mxu0 %v279
    %979 = vmatpush2.msra.mxu0 %v278
    %980 = vmatprep.subr.mxu0 %v275
    %981 = vmatpush2.msra.mxu0 %v274
    %982 = vmatprep.subr.mxu0 %v271
    %983 = vmatpush2.msra.mxu0 %v270
    %984 = vmatprep.subr.mxu0 %v267
    %985 = vmatpush2.msra.mxu0 %v266
    %986 = vmatprep.subr.mxu0 %v263
    %987 = vmatpush2.msra.mxu0 %v262
    %988 = vmatprep.subr.mxu0 %v259
    %989 = vmatpush2.msra.mxu0 %v258
    %990 = vmatprep.subr.mxu0 %v255
    %991 = vmatpush2.msra.mxu0 %v254
    %992 = vmatprep.subr.mxu0 %v251
    %993 = vmatpush2.msra.mxu0 %v250
    %994 = vmatprep.subr.mxu0 %v247
    %995 = vmatpush2.msra.mxu0 %v246
    %996 = vmatprep.subr.mxu0 %v243
    %997 = vmatpush2.msra.mxu0 %v242
    %998 = vmatprep.subr.mxu0 %v239
    %999 = vmatpush2.msra.mxu0 %v238
    %1000 = vmatprep.subr.mxu0 %v235
    %1001 = vmatpush2.msra.mxu0 %v234
    %1002 = vmatprep.mubr.f32.mxu0 %v41
    %1003 = vmatmul.mubr.f32.gmra.mxu0 %v40
    %v1004 = vpop.f32.mrf.mxu0
    %v1005 = vadd.f32 0.0, %v1004
    %v1006 = vpop.f32.mrf.mxu0
    %v1007 = vadd.f32 0.0, %v1006
    %1008 = vmatprep.mubr.f32.mxu0 %v45
    %1009 = vmatmul.mubr.f32.gmra.mxu0 %v44
    %v1010 = vpop.f32.mrf.mxu0
    %v1011 = vadd.f32 0.0, %v1010
    %v1012 = vpop.f32.mrf.mxu0
    %v1013 = vadd.f32 0.0, %v1012
    %1014 = vmatprep.mubr.f32.mxu0 %v49
    %1015 = vmatmul.mubr.f32.gmra.mxu0 %v48
    %v1016 = vpop.f32.mrf.mxu0
    %v1017 = vadd.f32 0.0, %v1016
    %v1018 = vpop.f32.mrf.mxu0
    %v1019 = vadd.f32 0.0, %v1018
    %1020 = vmatprep.mubr.f32.mxu0 %v53
    %1021 = vmatmul.mubr.f32.gmra.mxu0 %v52
    %v1022 = vpop.f32.mrf.mxu0
    %v1023 = vadd.f32 0.0, %v1022
    %v1024 = vpop.f32.mrf.mxu0
    %v1025 = vadd.f32 0.0, %v1024
    %1026 = vmatprep.mubr.f32.mxu0 %v57
    %1027 = vmatmul.mubr.f32.gmra.mxu0 %v56
    %v1028 = vpop.f32.mrf.mxu0
    %v1029 = vadd.f32 0.0, %v1028
    %v1030 = vpop.f32.mrf.mxu0
    %v1031 = vadd.f32 0.0, %v1030
    %1032 = vmatprep.mubr.f32.mxu0 %v61
    %1033 = vmatmul.mubr.f32.gmra.mxu0 %v60
    %v1034 = vpop.f32.mrf.mxu0
    %v1035 = vadd.f32 0.0, %v1034
    %v1036 = vpop.f32.mrf.mxu0
    %v1037 = vadd.f32 0.0, %v1036
    %1038 = vmatprep.mubr.f32.mxu0 %v65
    %1039 = vmatmul.mubr.f32.gmra.mxu0 %v64
    %v1040 = vpop.f32.mrf.mxu0
    %v1041 = vadd.f32 0.0, %v1040
    %v1042 = vpop.f32.mrf.mxu0
    %v1043 = vadd.f32 0.0, %v1042
    %1044 = vmatprep.mubr.f32.mxu0 %v69
    %1045 = vmatmul.mubr.f32.gmra.mxu0 %v68
    %v1046 = vpop.f32.mrf.mxu0
    %v1047 = vadd.f32 0.0, %v1046
    %v1048 = vpop.f32.mrf.mxu0
    %v1049 = vadd.f32 0.0, %v1048
    %1050 = vmatprep.mubr.f32.mxu0 %v73
    %1051 = vmatmul.mubr.f32.gmra.mxu0 %v72
    %v1052 = vpop.f32.mrf.mxu0
    %v1053 = vadd.f32 0.0, %v1052
    %v1054 = vpop.f32.mrf.mxu0
    %v1055 = vadd.f32 0.0, %v1054
    %1056 = vmatprep.mubr.f32.mxu0 %v77
    %1057 = vmatmul.mubr.f32.gmra.mxu0 %v76
    %v1058 = vpop.f32.mrf.mxu0
    %v1059 = vadd.f32 0.0, %v1058
    %v1060 = vpop.f32.mrf.mxu0
    %v1061 = vadd.f32 0.0, %v1060
    %1062 = vmatprep.mubr.f32.mxu0 %v81
    %1063 = vmatmul.mubr.f32.gmra.mxu0 %v80
    %v1064 = vpop.f32.mrf.mxu0
    %v1065 = vadd.f32 0.0, %v1064
    %v1066 = vpop.f32.mrf.mxu0
    %v1067 = vadd.f32 0.0, %v1066
    %1068 = vmatprep.mubr.f32.mxu0 %v85
    %1069 = vmatmul.mubr.f32.gmra.mxu0 %v84
    %v1070 = vpop.f32.mrf.mxu0
    %v1071 = vadd.f32 0.0, %v1070
    %v1072 = vpop.f32.mrf.mxu0
    %v1073 = vadd.f32 0.0, %v1072
    %1074 = vmatprep.mubr.f32.mxu0 %v89
    %1075 = vmatmul.mubr.f32.gmra.mxu0 %v88
    %v1076 = vpop.f32.mrf.mxu0
    %v1077 = vadd.f32 0.0, %v1076
    %v1078 = vpop.f32.mrf.mxu0
    %v1079 = vadd.f32 0.0, %v1078
    %1080 = vmatprep.mubr.f32.mxu0 %v93
    %1081 = vmatmul.mubr.f32.gmra.mxu0 %v92
    %v1082 = vpop.f32.mrf.mxu0
    %v1083 = vadd.f32 0.0, %v1082
    %v1084 = vpop.f32.mrf.mxu0
    %v1085 = vadd.f32 0.0, %v1084
    %1086 = vmatprep.mubr.f32.mxu0 %v97
    %1087 = vmatmul.mubr.f32.gmra.mxu0 %v96
    %v1088 = vpop.f32.mrf.mxu0
    %v1089 = vadd.f32 0.0, %v1088
    %v1090 = vpop.f32.mrf.mxu0
    %v1091 = vadd.f32 0.0, %v1090
    %1092 = vmatprep.mubr.f32.mxu0 %v101
    %1093 = vmatmul.mubr.f32.gmra.mxu0 %v100
    %v1094 = vpop.f32.mrf.mxu0
    %v1095 = vadd.f32 0.0, %v1094
    %v1096 = vpop.f32.mrf.mxu0
    %v1097 = vadd.f32 0.0, %v1096
    %1098 = vmatprep.mubr.f32.mxu0 %v105
    %1099 = vmatmul.mubr.f32.gmra.mxu0 %v104
    %v1100 = vpop.f32.mrf.mxu0
    %v1101 = vadd.f32 0.0, %v1100
    %v1102 = vpop.f32.mrf.mxu0
    %v1103 = vadd.f32 0.0, %v1102
    %1104 = vmatprep.mubr.f32.mxu0 %v109
    %1105 = vmatmul.mubr.f32.gmra.mxu0 %v108
    %v1106 = vpop.f32.mrf.mxu0
    %v1107 = vadd.f32 0.0, %v1106
    %v1108 = vpop.f32.mrf.mxu0
    %v1109 = vadd.f32 0.0, %v1108
    %1110 = vmatprep.mubr.f32.mxu0 %v113
    %1111 = vmatmul.mubr.f32.gmra.mxu0 %v112
    %v1112 = vpop.f32.mrf.mxu0
    %v1113 = vadd.f32 0.0, %v1112
    %v1114 = vpop.f32.mrf.mxu0
    %v1115 = vadd.f32 0.0, %v1114
    %1116 = vmatprep.mubr.f32.mxu0 %v117
    %1117 = vmatmul.mubr.f32.gmra.mxu0 %v116
    %v1118 = vpop.f32.mrf.mxu0
    %v1119 = vadd.f32 0.0, %v1118
    %v1120 = vpop.f32.mrf.mxu0
    %v1121 = vadd.f32 0.0, %v1120
    %1122 = vmatprep.mubr.f32.mxu0 %v121
    %1123 = vmatmul.mubr.f32.gmra.mxu0 %v120
    %v1124 = vpop.f32.mrf.mxu0
    %v1125 = vadd.f32 0.0, %v1124
    %v1126 = vpop.f32.mrf.mxu0
    %v1127 = vadd.f32 0.0, %v1126
    %1128 = vmatprep.mubr.f32.mxu0 %v125
    %1129 = vmatmul.mubr.f32.gmra.mxu0 %v124
    %v1130 = vpop.f32.mrf.mxu0
    %v1131 = vadd.f32 0.0, %v1130
    %v1132 = vpop.f32.mrf.mxu0
    %v1133 = vadd.f32 0.0, %v1132
    %1134 = vmatprep.mubr.f32.mxu0 %v129
    %1135 = vmatmul.mubr.f32.gmra.mxu0 %v128
    %v1136 = vpop.f32.mrf.mxu0
    %v1137 = vadd.f32 0.0, %v1136
    %v1138 = vpop.f32.mrf.mxu0
    %v1139 = vadd.f32 0.0, %v1138
    %1140 = vmatprep.mubr.f32.mxu0 %v133
    %1141 = vmatmul.mubr.f32.gmra.mxu0 %v132
    %v1142 = vpop.f32.mrf.mxu0
    %v1143 = vadd.f32 0.0, %v1142
    %v1144 = vpop.f32.mrf.mxu0
    %v1145 = vadd.f32 0.0, %v1144
    %1146 = vmatprep.mubr.f32.mxu0 %v137
    %1147 = vmatmul.mubr.f32.gmra.mxu0 %v136
    %v1148 = vpop.f32.mrf.mxu0
    %v1149 = vadd.f32 0.0, %v1148
    %v1150 = vpop.f32.mrf.mxu0
    %v1151 = vadd.f32 0.0, %v1150
    %1152 = vmatprep.mubr.f32.mxu0 %v141
    %1153 = vmatmul.mubr.f32.gmra.mxu0 %v140
    %v1154 = vpop.f32.mrf.mxu0
    %v1155 = vadd.f32 0.0, %v1154
    %v1156 = vpop.f32.mrf.mxu0
    %v1157 = vadd.f32 0.0, %v1156
    %1158 = vmatprep.mubr.f32.mxu0 %v145
    %1159 = vmatmul.mubr.f32.gmra.mxu0 %v144
    %v1160 = vpop.f32.mrf.mxu0
    %v1161 = vadd.f32 0.0, %v1160
    %v1162 = vpop.f32.mrf.mxu0
    %v1163 = vadd.f32 0.0, %v1162
    %1164 = vmatprep.mubr.f32.mxu0 %v149
    %1165 = vmatmul.mubr.f32.gmra.mxu0 %v148
    %v1166 = vpop.f32.mrf.mxu0
    %v1167 = vadd.f32 0.0, %v1166
    %v1168 = vpop.f32.mrf.mxu0
    %v1169 = vadd.f32 0.0, %v1168
    %1170 = vmatprep.mubr.f32.mxu0 %v153
    %1171 = vmatmul.mubr.f32.gmra.mxu0 %v152
    %v1172 = vpop.f32.mrf.mxu0
    %v1173 = vadd.f32 0.0, %v1172
    %v1174 = vpop.f32.mrf.mxu0
    %v1175 = vadd.f32 0.0, %v1174
    %1176 = vmatprep.mubr.f32.mxu0 %v157
    %1177 = vmatmul.mubr.f32.gmra.mxu0 %v156
    %v1178 = vpop.f32.mrf.mxu0
    %v1179 = vadd.f32 0.0, %v1178
    %v1180 = vpop.f32.mrf.mxu0
    %v1181 = vadd.f32 0.0, %v1180
    %1182 = vmatprep.mubr.f32.mxu0 %v161
    %1183 = vmatmul.mubr.f32.gmra.mxu0 %v160
    %v1184 = vpop.f32.mrf.mxu0
    %v1185 = vadd.f32 0.0, %v1184
    %v1186 = vpop.f32.mrf.mxu0
    %v1187 = vadd.f32 0.0, %v1186
    %1188 = vmatprep.mubr.f32.mxu0 %v165
    %1189 = vmatmul.mubr.f32.gmra.mxu0 %v164
    %v1190 = vpop.f32.mrf.mxu0
    %v1191 = vadd.f32 0.0, %v1190
    %v1192 = vpop.f32.mrf.mxu0
    %v1193 = vadd.f32 0.0, %v1192
    %1194 = vdwg.mxu0
    %1195 = vmatprep.subr.mxu0 %v359
    %1196 = vmatpush1.msra.mxu0 %v358
    %1197 = vmatprep.subr.mxu0 %v355
    %1198 = vmatpush1.msra.mxu0 %v354
    %1199 = vmatprep.subr.mxu0 %v351
    %1200 = vmatpush1.msra.mxu0 %v350
    %1201 = vmatprep.subr.mxu0 %v347
    %1202 = vmatpush1.msra.mxu0 %v346
    %1203 = vmatprep.subr.mxu0 %v343
    %1204 = vmatpush1.msra.mxu0 %v342
    %1205 = vmatprep.subr.mxu0 %v339
    %1206 = vmatpush1.msra.mxu0 %v338
    %1207 = vmatprep.subr.mxu0 %v335
    %1208 = vmatpush1.msra.mxu0 %v334
    %1209 = vmatprep.subr.mxu0 %v331
    %1210 = vmatpush1.msra.mxu0 %v330
    %1211 = vmatprep.subr.mxu0 %v327
    %1212 = vmatpush1.msra.mxu0 %v326
    %1213 = vmatprep.subr.mxu0 %v323
    %1214 = vmatpush1.msra.mxu0 %v322
    %1215 = vmatprep.subr.mxu0 %v319
    %1216 = vmatpush1.msra.mxu0 %v318
    %1217 = vmatprep.subr.mxu0 %v315
    %1218 = vmatpush1.msra.mxu0 %v314
    %1219 = vmatprep.subr.mxu0 %v311
    %1220 = vmatpush1.msra.mxu0 %v310
    %1221 = vmatprep.subr.mxu0 %v307
    %1222 = vmatpush1.msra.mxu0 %v306
    %1223 = vmatprep.subr.mxu0 %v303
    %1224 = vmatpush1.msra.mxu0 %v302
    %1225 = vmatprep.subr.mxu0 %v299
    %1226 = vmatpush1.msra.mxu0 %v298
    %1227 = vmatprep.subr.mxu0 %v423
    %1228 = vmatpush2.msra.mxu0 %v422
    %1229 = vmatprep.subr.mxu0 %v419
    %1230 = vmatpush2.msra.mxu0 %v418
    %1231 = vmatprep.subr.mxu0 %v415
    %1232 = vmatpush2.msra.mxu0 %v414
    %1233 = vmatprep.subr.mxu0 %v411
    %1234 = vmatpush2.msra.mxu0 %v410
    %1235 = vmatprep.subr.mxu0 %v407
    %1236 = vmatpush2.msra.mxu0 %v406
    %1237 = vmatprep.subr.mxu0 %v403
    %1238 = vmatpush2.msra.mxu0 %v402
    %1239 = vmatprep.subr.mxu0 %v399
    %1240 = vmatpush2.msra.mxu0 %v398
    %1241 = vmatprep.subr.mxu0 %v395
    %1242 = vmatpush2.msra.mxu0 %v394
    %1243 = vmatprep.subr.mxu0 %v391
    %1244 = vmatpush2.msra.mxu0 %v390
    %1245 = vmatprep.subr.mxu0 %v387
    %1246 = vmatpush2.msra.mxu0 %v386
    %1247 = vmatprep.subr.mxu0 %v383
    %1248 = vmatpush2.msra.mxu0 %v382
    %1249 = vmatprep.subr.mxu0 %v379
    %1250 = vmatpush2.msra.mxu0 %v378
    %1251 = vmatprep.subr.mxu0 %v375
    %1252 = vmatpush2.msra.mxu0 %v374
    %1253 = vmatprep.subr.mxu0 %v371
    %1254 = vmatpush2.msra.mxu0 %v370
    %1255 = vmatprep.subr.mxu0 %v367
    %1256 = vmatpush2.msra.mxu0 %v366
    %1257 = vmatprep.subr.mxu0 %v363
    %1258 = vmatpush2.msra.mxu0 %v362
    %1259 = vmatprep.mubr.f32.mxu0 %v43
    %1260 = vmatmul.mubr.f32.gmra.mxu0 %v42
    %v1261 = vpop.f32.mrf.mxu0
    %v1262 = vadd.f32 %v1005, %v1261
    %v1263 = vpop.f32.mrf.mxu0
    %v1264 = vadd.f32 %v1007, %v1263
    %1265 = vmatprep.mubr.f32.mxu0 %v47
    %1266 = vmatmul.mubr.f32.gmra.mxu0 %v46
    %v1267 = vpop.f32.mrf.mxu0
    %v1268 = vadd.f32 %v1011, %v1267
    %v1269 = vpop.f32.mrf.mxu0
    %v1270 = vadd.f32 %v1013, %v1269
    %1271 = vmatprep.mubr.f32.mxu0 %v51
    %1272 = vmatmul.mubr.f32.gmra.mxu0 %v50
    %v1273 = vpop.f32.mrf.mxu0
    %v1274 = vadd.f32 %v1017, %v1273
    %v1275 = vpop.f32.mrf.mxu0
    %v1276 = vadd.f32 %v1019, %v1275
    %1277 = vmatprep.mubr.f32.mxu0 %v55
    %1278 = vmatmul.mubr.f32.gmra.mxu0 %v54
    %v1279 = vpop.f32.mrf.mxu0
    %v1280 = vadd.f32 %v1023, %v1279
    %v1281 = vpop.f32.mrf.mxu0
    %v1282 = vadd.f32 %v1025, %v1281
    %1283 = vmatprep.mubr.f32.mxu0 %v59
    %1284 = vmatmul.mubr.f32.gmra.mxu0 %v58
    %v1285 = vpop.f32.mrf.mxu0
    %v1286 = vadd.f32 %v1029, %v1285
    %v1287 = vpop.f32.mrf.mxu0
    %v1288 = vadd.f32 %v1031, %v1287
    %1289 = vmatprep.mubr.f32.mxu0 %v63
    %1290 = vmatmul.mubr.f32.gmra.mxu0 %v62
    %v1291 = vpop.f32.mrf.mxu0
    %v1292 = vadd.f32 %v1035, %v1291
    %v1293 = vpop.f32.mrf.mxu0
    %v1294 = vadd.f32 %v1037, %v1293
    %1295 = vmatprep.mubr.f32.mxu0 %v67
    %1296 = vmatmul.mubr.f32.gmra.mxu0 %v66
    %v1297 = vpop.f32.mrf.mxu0
    %v1298 = vadd.f32 %v1041, %v1297
    %v1299 = vpop.f32.mrf.mxu0
    %v1300 = vadd.f32 %v1043, %v1299
    %1301 = vmatprep.mubr.f32.mxu0 %v71
    %1302 = vmatmul.mubr.f32.gmra.mxu0 %v70
    %v1303 = vpop.f32.mrf.mxu0
    %v1304 = vadd.f32 %v1047, %v1303
    %v1305 = vpop.f32.mrf.mxu0
    %v1306 = vadd.f32 %v1049, %v1305
    %1307 = vmatprep.mubr.f32.mxu0 %v75
    %1308 = vmatmul.mubr.f32.gmra.mxu0 %v74
    %v1309 = vpop.f32.mrf.mxu0
    %v1310 = vadd.f32 %v1053, %v1309
    %v1311 = vpop.f32.mrf.mxu0
    %v1312 = vadd.f32 %v1055, %v1311
    %1313 = vmatprep.mubr.f32.mxu0 %v79
    %1314 = vmatmul.mubr.f32.gmra.mxu0 %v78
    %v1315 = vpop.f32.mrf.mxu0
    %v1316 = vadd.f32 %v1059, %v1315
    %v1317 = vpop.f32.mrf.mxu0
    %v1318 = vadd.f32 %v1061, %v1317
    %1319 = vmatprep.mubr.f32.mxu0 %v83
    %1320 = vmatmul.mubr.f32.gmra.mxu0 %v82
    %v1321 = vpop.f32.mrf.mxu0
    %v1322 = vadd.f32 %v1065, %v1321
    %v1323 = vpop.f32.mrf.mxu0
    %v1324 = vadd.f32 %v1067, %v1323
    %1325 = vmatprep.mubr.f32.mxu0 %v87
    %1326 = vmatmul.mubr.f32.gmra.mxu0 %v86
    %v1327 = vpop.f32.mrf.mxu0
    %v1328 = vadd.f32 %v1071, %v1327
    %v1329 = vpop.f32.mrf.mxu0
    %v1330 = vadd.f32 %v1073, %v1329
    %1331 = vmatprep.mubr.f32.mxu0 %v91
    %1332 = vmatmul.mubr.f32.gmra.mxu0 %v90
    %v1333 = vpop.f32.mrf.mxu0
    %v1334 = vadd.f32 %v1077, %v1333
    %v1335 = vpop.f32.mrf.mxu0
    %v1336 = vadd.f32 %v1079, %v1335
    %1337 = vmatprep.mubr.f32.mxu0 %v95
    %1338 = vmatmul.mubr.f32.gmra.mxu0 %v94
    %v1339 = vpop.f32.mrf.mxu0
    %v1340 = vadd.f32 %v1083, %v1339
    %v1341 = vpop.f32.mrf.mxu0
    %v1342 = vadd.f32 %v1085, %v1341
    %1343 = vmatprep.mubr.f32.mxu0 %v99
    %1344 = vmatmul.mubr.f32.gmra.mxu0 %v98
    %v1345 = vpop.f32.mrf.mxu0
    %v1346 = vadd.f32 %v1089, %v1345
    %v1347 = vpop.f32.mrf.mxu0
    %v1348 = vadd.f32 %v1091, %v1347
    %1349 = vmatprep.mubr.f32.mxu0 %v103
    %1350 = vmatmul.mubr.f32.gmra.mxu0 %v102
    %v1351 = vpop.f32.mrf.mxu0
    %v1352 = vadd.f32 %v1095, %v1351
    %v1353 = vpop.f32.mrf.mxu0
    %v1354 = vadd.f32 %v1097, %v1353
    %1355 = vmatprep.mubr.f32.mxu0 %v107
    %1356 = vmatmul.mubr.f32.gmra.mxu0 %v106
    %v1357 = vpop.f32.mrf.mxu0
    %v1358 = vadd.f32 %v1101, %v1357
    %v1359 = vpop.f32.mrf.mxu0
    %v1360 = vadd.f32 %v1103, %v1359
    %1361 = vmatprep.mubr.f32.mxu0 %v111
    %1362 = vmatmul.mubr.f32.gmra.mxu0 %v110
    %v1363 = vpop.f32.mrf.mxu0
    %v1364 = vadd.f32 %v1107, %v1363
    %v1365 = vpop.f32.mrf.mxu0
    %v1366 = vadd.f32 %v1109, %v1365
    %1367 = vmatprep.mubr.f32.mxu0 %v115
    %1368 = vmatmul.mubr.f32.gmra.mxu0 %v114
    %v1369 = vpop.f32.mrf.mxu0
    %v1370 = vadd.f32 %v1113, %v1369
    %v1371 = vpop.f32.mrf.mxu0
    %v1372 = vadd.f32 %v1115, %v1371
    %1373 = vmatprep.mubr.f32.mxu0 %v119
    %1374 = vmatmul.mubr.f32.gmra.mxu0 %v118
    %v1375 = vpop.f32.mrf.mxu0
    %v1376 = vadd.f32 %v1119, %v1375
    %v1377 = vpop.f32.mrf.mxu0
    %v1378 = vadd.f32 %v1121, %v1377
    %1379 = vmatprep.mubr.f32.mxu0 %v123
    %1380 = vmatmul.mubr.f32.gmra.mxu0 %v122
    %v1381 = vpop.f32.mrf.mxu0
    %v1382 = vadd.f32 %v1125, %v1381
    %v1383 = vpop.f32.mrf.mxu0
    %v1384 = vadd.f32 %v1127, %v1383
    %1385 = vmatprep.mubr.f32.mxu0 %v127
    %1386 = vmatmul.mubr.f32.gmra.mxu0 %v126
    %v1387 = vpop.f32.mrf.mxu0
    %v1388 = vadd.f32 %v1131, %v1387
    %v1389 = vpop.f32.mrf.mxu0
    %v1390 = vadd.f32 %v1133, %v1389
    %1391 = vmatprep.mubr.f32.mxu0 %v131
    %1392 = vmatmul.mubr.f32.gmra.mxu0 %v130
    %v1393 = vpop.f32.mrf.mxu0
    %v1394 = vadd.f32 %v1137, %v1393
    %v1395 = vpop.f32.mrf.mxu0
    %v1396 = vadd.f32 %v1139, %v1395
    %1397 = vmatprep.mubr.f32.mxu0 %v135
    %1398 = vmatmul.mubr.f32.gmra.mxu0 %v134
    %v1399 = vpop.f32.mrf.mxu0
    %v1400 = vadd.f32 %v1143, %v1399
    %v1401 = vpop.f32.mrf.mxu0
    %v1402 = vadd.f32 %v1145, %v1401
    %1403 = vmatprep.mubr.f32.mxu0 %v139
    %1404 = vmatmul.mubr.f32.gmra.mxu0 %v138
    %v1405 = vpop.f32.mrf.mxu0
    %v1406 = vadd.f32 %v1149, %v1405
    %v1407 = vpop.f32.mrf.mxu0
    %v1408 = vadd.f32 %v1151, %v1407
    %1409 = vmatprep.mubr.f32.mxu0 %v143
    %1410 = vmatmul.mubr.f32.gmra.mxu0 %v142
    %v1411 = vpop.f32.mrf.mxu0
    %v1412 = vadd.f32 %v1155, %v1411
    %v1413 = vpop.f32.mrf.mxu0
    %v1414 = vadd.f32 %v1157, %v1413
    %1415 = vmatprep.mubr.f32.mxu0 %v147
    %1416 = vmatmul.mubr.f32.gmra.mxu0 %v146
    %v1417 = vpop.f32.mrf.mxu0
    %v1418 = vadd.f32 %v1161, %v1417
    %v1419 = vpop.f32.mrf.mxu0
    %v1420 = vadd.f32 %v1163, %v1419
    %1421 = vmatprep.mubr.f32.mxu0 %v151
    %1422 = vmatmul.mubr.f32.gmra.mxu0 %v150
    %v1423 = vpop.f32.mrf.mxu0
    %v1424 = vadd.f32 %v1167, %v1423
    %v1425 = vpop.f32.mrf.mxu0
    %v1426 = vadd.f32 %v1169, %v1425
    %1427 = vmatprep.mubr.f32.mxu0 %v155
    %1428 = vmatmul.mubr.f32.gmra.mxu0 %v154
    %v1429 = vpop.f32.mrf.mxu0
    %v1430 = vadd.f32 %v1173, %v1429
    %v1431 = vpop.f32.mrf.mxu0
    %v1432 = vadd.f32 %v1175, %v1431
    %1433 = vmatprep.mubr.f32.mxu0 %v159
    %1434 = vmatmul.mubr.f32.gmra.mxu0 %v158
    %v1435 = vpop.f32.mrf.mxu0
    %v1436 = vadd.f32 %v1179, %v1435
    %v1437 = vpop.f32.mrf.mxu0
    %v1438 = vadd.f32 %v1181, %v1437
    %1439 = vmatprep.mubr.f32.mxu0 %v163
    %1440 = vmatmul.mubr.f32.gmra.mxu0 %v162
    %v1441 = vpop.f32.mrf.mxu0
    %v1442 = vadd.f32 %v1185, %v1441
    %v1443 = vpop.f32.mrf.mxu0
    %v1444 = vadd.f32 %v1187, %v1443
    %1445 = vmatprep.mubr.f32.mxu0 %v167
    %1446 = vmatmul.mubr.f32.gmra.mxu0 %v166
    %v1447 = vpop.f32.mrf.mxu0
    %v1448 = vadd.f32 %v1191, %v1447
    %v1449 = vpop.f32.mrf.mxu0
    %v1450 = vadd.f32 %v1193, %v1449
    %1451 = vdwg.mxu0
    %1452 = vst [vmem:[#allocation7] sm:$0xff] %v748
    %1453 = vst [vmem:[#allocation7 + $0x8] sm:$0xff] %v750
    %1454 = vst [vmem:[#allocation7 + $0x10] sm:$0xff] %v1262
    %1455 = vst [vmem:[#allocation7 + $0x18] sm:$0xff] %v1264
    %1456 = vst [vmem:[#allocation7 + $0x20] sm:$0xff] %v754
    %1457 = vst [vmem:[#allocation7 + $0x28] sm:$0xff] %v756
    %1458 = vst [vmem:[#allocation7 + $0x30] sm:$0xff] %v1268
    %1459 = vst [vmem:[#allocation7 + $0x38] sm:$0xff] %v1270
    %1460 = vst [vmem:[#allocation7 + $0x40] sm:$0xff] %v760
    %1461 = vst [vmem:[#allocation7 + $0x48] sm:$0xff] %v762
    %1462 = vst [vmem:[#allocation7 + $0x50] sm:$0xff] %v1274
    %1463 = vst [vmem:[#allocation7 + $0x58] sm:$0xff] %v1276
    %1464 = vst [vmem:[#allocation7 + $0x60] sm:$0xff] %v766
    %1465 = vst [vmem:[#allocation7 + $0x68] sm:$0xff] %v768
    %1466 = vst [vmem:[#allocation7 + $0x70] sm:$0xff] %v1280
    %1467 = vst [vmem:[#allocation7 + $0x78] sm:$0xff] %v1282
    %1468 = vst [vmem:[#allocation7 + $0x80] sm:$0xff] %v772
    %1469 = vst [vmem:[#allocation7 + $0x88] sm:$0xff] %v774
    %1470 = vst [vmem:[#allocation7 + $0x90] sm:$0xff] %v1286
    %1471 = vst [vmem:[#allocation7 + $0x98] sm:$0xff] %v1288
    %1472 = vst [vmem:[#allocation7 + $0xa0] sm:$0xff] %v778
    %1473 = vst [vmem:[#allocation7 + $0xa8] sm:$0xff] %v780
    %1474 = vst [vmem:[#allocation7 + $0xb0] sm:$0xff] %v1292
    %1475 = vst [vmem:[#allocation7 + $0xb8] sm:$0xff] %v1294
    %1476 = vst [vmem:[#allocation7 + $0xc0] sm:$0xff] %v784
    %1477 = vst [vmem:[#allocation7 + $0xc8] sm:$0xff] %v786
    %1478 = vst [vmem:[#allocation7 + $0xd0] sm:$0xff] %v1298
    %1479 = vst [vmem:[#allocation7 + $0xd8] sm:$0xff] %v1300
    %1480 = vst [vmem:[#allocation7 + $0xe0] sm:$0xff] %v790
    %1481 = vst [vmem:[#allocation7 + $0xe8] sm:$0xff] %v792
    %1482 = vst [vmem:[#allocation7 + $0xf0] sm:$0xff] %v1304
    %1483 = vst [vmem:[#allocation7 + $0xf8] sm:$0xff] %v1306
    %1484 = vst [vmem:[#allocation7 + $0x100] sm:$0xff] %v796
    %1485 = vst [vmem:[#allocation7 + $0x108] sm:$0xff] %v798
    %1486 = vst [vmem:[#allocation7 + $0x110] sm:$0xff] %v1310
    %1487 = vst [vmem:[#allocation7 + $0x118] sm:$0xff] %v1312
    %1488 = vst [vmem:[#allocation7 + $0x120] sm:$0xff] %v802
    %1489 = vst [vmem:[#allocation7 + $0x128] sm:$0xff] %v804
    %1490 = vst [vmem:[#allocation7 + $0x130] sm:$0xff] %v1316
    %1491 = vst [vmem:[#allocation7 + $0x138] sm:$0xff] %v1318
    %1492 = vst [vmem:[#allocation7 + $0x140] sm:$0xff] %v808
    %1493 = vst [vmem:[#allocation7 + $0x148] sm:$0xff] %v810
    %1494 = vst [vmem:[#allocation7 + $0x150] sm:$0xff] %v1322
    %1495 = vst [vmem:[#allocation7 + $0x158] sm:$0xff] %v1324
    %1496 = vst [vmem:[#allocation7 + $0x160] sm:$0xff] %v814
    %1497 = vst [vmem:[#allocation7 + $0x168] sm:$0xff] %v816
    %1498 = vst [vmem:[#allocation7 + $0x170] sm:$0xff] %v1328
    %1499 = vst [vmem:[#allocation7 + $0x178] sm:$0xff] %v1330
    %1500 = vst [vmem:[#allocation7 + $0x180] sm:$0xff] %v820
    %1501 = vst [vmem:[#allocation7 + $0x188] sm:$0xff] %v822
    %1502 = vst [vmem:[#allocation7 + $0x190] sm:$0xff] %v1334
    %1503 = vst [vmem:[#allocation7 + $0x198] sm:$0xff] %v1336
    %1504 = vst [vmem:[#allocation7 + $0x1a0] sm:$0xff] %v826
    %1505 = vst [vmem:[#allocation7 + $0x1a8] sm:$0xff] %v828
    %1506 = vst [vmem:[#allocation7 + $0x1b0] sm:$0xff] %v1340
    %1507 = vst [vmem:[#allocation7 + $0x1b8] sm:$0xff] %v1342
    %1508 = vst [vmem:[#allocation7 + $0x1c0] sm:$0xff] %v832
    %1509 = vst [vmem:[#allocation7 + $0x1c8] sm:$0xff] %v834
    %1510 = vst [vmem:[#allocation7 + $0x1d0] sm:$0xff] %v1346
    %1511 = vst [vmem:[#allocation7 + $0x1d8] sm:$0xff] %v1348
    %1512 = vst [vmem:[#allocation7 + $0x1e0] sm:$0xff] %v838
    %1513 = vst [vmem:[#allocation7 + $0x1e8] sm:$0xff] %v840
    %1514 = vst [vmem:[#allocation7 + $0x1f0] sm:$0xff] %v1352
    %1515 = vst [vmem:[#allocation7 + $0x1f8] sm:$0xff] %v1354
    %1516 = vst [vmem:[#allocation7 + $0x200] sm:$0xff] %v844
    %1517 = vst [vmem:[#allocation7 + $0x208] sm:$0xff] %v846
    %1518 = vst [vmem:[#allocation7 + $0x210] sm:$0xff] %v1358
    %1519 = vst [vmem:[#allocation7 + $0x218] sm:$0xff] %v1360
    %1520 = vst [vmem:[#allocation7 + $0x220] sm:$0xff] %v850
    %1521 = vst [vmem:[#allocation7 + $0x228] sm:$0xff] %v852
    %1522 = vst [vmem:[#allocation7 + $0x230] sm:$0xff] %v1364
    %1523 = vst [vmem:[#allocation7 + $0x238] sm:$0xff] %v1366
    %1524 = vst [vmem:[#allocation7 + $0x240] sm:$0xff] %v856
    %1525 = vst [vmem:[#allocation7 + $0x248] sm:$0xff] %v858
    %1526 = vst [vmem:[#allocation7 + $0x250] sm:$0xff] %v1370
    %1527 = vst [vmem:[#allocation7 + $0x258] sm:$0xff] %v1372
    %1528 = vst [vmem:[#allocation7 + $0x260] sm:$0xff] %v862
    %1529 = vst [vmem:[#allocation7 + $0x268] sm:$0xff] %v864
    %1530 = vst [vmem:[#allocation7 + $0x270] sm:$0xff] %v1376
    %1531 = vst [vmem:[#allocation7 + $0x278] sm:$0xff] %v1378
    %1532 = vst [vmem:[#allocation7 + $0x280] sm:$0xff] %v868
    %1533 = vst [vmem:[#allocation7 + $0x288] sm:$0xff] %v870
    %1534 = vst [vmem:[#allocation7 + $0x290] sm:$0xff] %v1382
    %1535 = vst [vmem:[#allocation7 + $0x298] sm:$0xff] %v1384
    %1536 = vst [vmem:[#allocation7 + $0x2a0] sm:$0xff] %v874
    %1537 = vst [vmem:[#allocation7 + $0x2a8] sm:$0xff] %v876
    %1538 = vst [vmem:[#allocation7 + $0x2b0] sm:$0xff] %v1388
    %1539 = vst [vmem:[#allocation7 + $0x2b8] sm:$0xff] %v1390
    %1540 = vst [vmem:[#allocation7 + $0x2c0] sm:$0xff] %v880
    %1541 = vst [vmem:[#allocation7 + $0x2c8] sm:$0xff] %v882
    %1542 = vst [vmem:[#allocation7 + $0x2d0] sm:$0xff] %v1394
    %1543 = vst [vmem:[#allocation7 + $0x2d8] sm:$0xff] %v1396
    %1544 = vst [vmem:[#allocation7 + $0x2e0] sm:$0xff] %v886
    %1545 = vst [vmem:[#allocation7 + $0x2e8] sm:$0xff] %v888
    %1546 = vst [vmem:[#allocation7 + $0x2f0] sm:$0xff] %v1400
    %1547 = vst [vmem:[#allocation7 + $0x2f8] sm:$0xff] %v1402
    %1548 = vst [vmem:[#allocation7 + $0x300] sm:$0xff] %v892
    %1549 = vst [vmem:[#allocation7 + $0x308] sm:$0xff] %v894
    %1550 = vst [vmem:[#allocation7 + $0x310] sm:$0xff] %v1406
    %1551 = vst [vmem:[#allocation7 + $0x318] sm:$0xff] %v1408
    %1552 = vst [vmem:[#allocation7 + $0x320] sm:$0xff] %v898
    %1553 = vst [vmem:[#allocation7 + $0x328] sm:$0xff] %v900
    %1554 = vst [vmem:[#allocation7 + $0x330] sm:$0xff] %v1412
    %1555 = vst [vmem:[#allocation7 + $0x338] sm:$0xff] %v1414
    %1556 = vst [vmem:[#allocation7 + $0x340] sm:$0xff] %v904
    %1557 = vst [vmem:[#allocation7 + $0x348] sm:$0xff] %v906
    %1558 = vst [vmem:[#allocation7 + $0x350] sm:$0xff] %v1418
    %1559 = vst [vmem:[#allocation7 + $0x358] sm:$0xff] %v1420
    %1560 = vst [vmem:[#allocation7 + $0x360] sm:$0xff] %v910
    %1561 = vst [vmem:[#allocation7 + $0x368] sm:$0xff] %v912
    %1562 = vst [vmem:[#allocation7 + $0x370] sm:$0xff] %v1424
    %1563 = vst [vmem:[#allocation7 + $0x378] sm:$0xff] %v1426
    %1564 = vst [vmem:[#allocation7 + $0x380] sm:$0xff] %v916
    %1565 = vst [vmem:[#allocation7 + $0x388] sm:$0xff] %v918
    %1566 = vst [vmem:[#allocation7 + $0x390] sm:$0xff] %v1430
    %1567 = vst [vmem:[#allocation7 + $0x398] sm:$0xff] %v1432
    %1568 = vst [vmem:[#allocation7 + $0x3a0] sm:$0xff] %v922
    %1569 = vst [vmem:[#allocation7 + $0x3a8] sm:$0xff] %v924
    %1570 = vst [vmem:[#allocation7 + $0x3b0] sm:$0xff] %v1436
    %1571 = vst [vmem:[#allocation7 + $0x3b8] sm:$0xff] %v1438
    %1572 = vst [vmem:[#allocation7 + $0x3c0] sm:$0xff] %v928
    %1573 = vst [vmem:[#allocation7 + $0x3c8] sm:$0xff] %v930
    %1574 = vst [vmem:[#allocation7 + $0x3d0] sm:$0xff] %v1442
    %1575 = vst [vmem:[#allocation7 + $0x3d8] sm:$0xff] %v1444
    %1576 = vst [vmem:[#allocation7 + $0x3e0] sm:$0xff] %v934
    %1577 = vst [vmem:[#allocation7 + $0x3e8] sm:$0xff] %v936
    %1578 = vst [vmem:[#allocation7 + $0x3f0] sm:$0xff] %v1448
    %1579 = vst [vmem:[#allocation7 + $0x3f8] sm:$0xff] %v1450
    // Predicated region
    $region18: #{tpu_custom_call.1} parent=1 // pred_check
      _
    $region19: #{tpu_custom_call.1} parent=1 // pred_check_branch
      %1581 = sbr.rel (0) target = $region21
    $region20: #{tpu_custom_call.1} parent=1 // pred_region
      %s1583 = ssub.s32 16384, 16384
      %1584 = vsyncadd [#allocation4], %s1583
      %s1585 = sshll.u32 [#allocation7], 4
      %s1586 = int_to_ptr.vmem [resolvable:$true] %s1585
      %1591 = dma.vmem_to_hbm [thread:$0]  %s1586, 16384, %s2, [#allocation4], 512, 512, 32
    $region21: #{tpu_custom_call.1} parent=1 // pred_fallthru
      _
    // Predicated region
    $region22: #{tpu_custom_call.1} parent=1 // pred_check
      _
    $region23: #{tpu_custom_call.1} parent=1 // pred_check_branch
      %1593 = sbr.rel (0) target = $region25
    $region24: #{tpu_custom_call.1} parent=1 // pred_region
      %1594 = dma.done [#allocation4], 16384
    $region25: #{tpu_custom_call.1} parent=1 // pred_fallthru
      _
    %1595 = vsyncpa [#allocation3], 1
    %1596 = vsyncpa [#allocation6], 1
    %1597 = vsyncpa [#allocation4], 1

</llo_original>
